<compile_context>
chip_gen: v7x
topology: tpu7x:2x2x1
jax: 0.10.0
libtpu: 0.0.40
codegen_flags: <defaults>
</compile_context>

<pallas_src>
import jax
import jax.numpy as jnp
from jax import lax
from jax.experimental import pallas as pl
from jax.experimental.pallas import tpu as pltpu

BN_EPS = 1e-5  # PyTorch BatchNorm2d default
_MB = 1024 * 1024


def _round_up(x, m):
    return (x + m - 1) // m * m


def _cdiv(a, b):
    return (a + b - 1) // b


def _row_chunk(coutp):
    # rows per in-kernel chunk: keep the live f32 chunk (4*rc, coutp) around ~128 KiB (<=32 vregs)
    return max(16, min(64, 8192 // coutp))


def _tpu_vmem_bytes():
    try:
        return int(pltpu.get_tpu_info().vmem_capacity_bytes)
    except Exception:
        return 64 * _MB  # conservative fallback (v7x per-core VMEM)


def _tiling_params(row_tile):
    """Generation-aware row tile / VMEM budget (bigger tiles on 128 MiB v5e/v6e, capped on v7x)."""
    vmem = _tpu_vmem_bytes()
    big = vmem >= 100 * _MB
    vmem_limit = 96 * _MB if big else 56 * _MB          # raised above the 32 MiB scoped default
    block_budget = 72 * _MB if big else 40 * _MB        # budget for double-buffered blocks
    if row_tile is None:
        row_tile = 2048 if big else 1024
    return row_tile, block_budget, vmem_limit


def _pick_row_tile(row_tile, n_rows, kp, coutp, budget):
    """Largest tile in {256,512,1024,2048} fitting the request, the problem and the VMEM budget."""
    cap = max(256, _round_up(min(_round_up(row_tile, 256), _round_up(n_rows, 256)), 256))
    tr = 256
    for cand in (512, 1024, 2048):
        blocks = 2 * (4 * cand * kp + 4 * cand * coutp + kp * coutp) * 2  # bf16, double-buffered
        if cand <= cap and blocks <= budget:
            tr = cand
    return tr


def _stats_kernel(p_ref, w_ref, conv_ref, sum_ref, sqsum_ref):
    """Pass 1: conv matmul for one (4, TR, Kp) row tile, chunked over rows.

    Writes the conv activations (bf16 cache consumed by pass 2) and accumulates the
    per-channel sum / sum-of-squares in (1, 1, Coutp) f32 blocks that stay resident across
    the trailing 'arbitrary' grid axis (one partial row per TensorCore on the leading
    'parallel' axis).
    """
    tr, kp = p_ref.shape[1], p_ref.shape[2]
    coutp = conv_ref.shape[2]
    rc = _row_chunk(coutp)

    @pl.when(pl.program_id(1) == 0)
    def _():
        sum_ref[...] = jnp.zeros_like(sum_ref)
        sqsum_ref[...] = jnp.zeros_like(sqsum_ref)

    def chunk(c, carry):
        r0 = pl.multiple_of(c * rc, rc)
        # (4, rc, Kp) -> (4*rc, Kp): free merge (rc % 16 == 0, Kp % 128 == 0)
        lhs = p_ref[:, pl.ds(r0, rc), :].reshape(4 * rc, kp)
        conv = jnp.dot(lhs, w_ref[...], preferred_element_type=jnp.float32)
        conv_ref[:, pl.ds(r0, rc), :] = conv.reshape(4, rc, coutp).astype(conv_ref.dtype)
        sum_ref[...] += jnp.sum(conv, axis=0).reshape(1, 1, coutp)
        sqsum_ref[...] += jnp.sum(conv * conv, axis=0).reshape(1, 1, coutp)
        return carry

    lax.fori_loop(0, tr // rc, chunk, 0, unroll=True)


def _apply_kernel(conv_ref, scale_ref, shift_ref, out_ref):
    """Pass 2: fused BN scale/shift + ReLU + 2x2 max-pool over the bf16 conv cache (no matmul)."""
    tr, coutp = out_ref.shape
    rc = _row_chunk(coutp)
    scale = scale_ref[...]          # (1, Coutp) f32, broadcast along sublanes
    shift = shift_ref[...]

    def chunk(c, carry):
        r0 = pl.multiple_of(c * rc, rc)
        cv = conv_ref[:, pl.ds(r0, rc), :].astype(jnp.float32)        # (4, rc, Coutp)
        act = jnp.maximum(cv * scale + shift, 0.0)
        pooled = jnp.maximum(jnp.maximum(act[0], act[1]), jnp.maximum(act[2], act[3]))
        out_ref[pl.ds(r0, rc), :] = pooled.astype(out_ref.dtype)
        return carry

    lax.fori_loop(0, tr // rc, chunk, 0, unroll=True)


def relation_conv_block(x_nchw, w, b, gamma, beta, padding=0, row_tile=None):
    """x_nchw: (N, Cin, H, W); w: (Cout, Cin, 3, 3); b/gamma/beta: (Cout,). Returns f32 NCHW."""
    del b  # conv bias cancels exactly in (conv - batch_mean) under training-mode BatchNorm
    N, Cin, H, W = x_nchw.shape
    Cout = w.shape[0]
    Ho, Wo = H + 2 * padding - 2, W + 2 * padding - 2
    assert Ho % 2 == 0 and Wo % 2 == 0, "conv output must be even for the 2x2 pooling layout"
    Hp, Wp = Ho // 2, Wo // 2
    R, K = N * Hp * Wp, 9 * Cin
    Kp = _round_up(K, 128)          # lane-dense matmul K dim
    Coutp = _round_up(Cout, 128)    # lane-dense output channels

    row_tile, block_budget, vmem_limit = _tiling_params(row_tile)
    TR = _pick_row_tile(row_tile, R, Kp, Coutp, block_budget)
    nr_half = _cdiv(_cdiv(R, TR), 2)    # row tiles per TensorCore (pass-1 'parallel' split)
    nr = 2 * nr_half
    Rp = nr * TR

    # ---------- glue (XLA data movement), bf16 to halve HBM/DMA bytes ----------
    # q-grouped im2col built directly from 36 strided slices of the NHWC input: no
    # full-tensor transposes of the 9x-expanded array; padding folded into the concats.
    x = jnp.transpose(x_nchw, (0, 2, 3, 1)).astype(jnp.bfloat16)            # NHWC bf16
    if padding:
        x = jnp.pad(x, ((0, 0), (padding, padding), (padding, padding), (0, 0)))

    def pool_group(py, px):  # rows for pool-window position (py, px): conv at (2hp+py, 2wp+px)
        taps = [x[:, py + dy: py + dy + 2 * Hp: 2, px + dx: px + dx + 2 * Wp: 2, :]
                for dy in range(3) for dx in range(3)]
        if Kp > K:
            taps.append(jnp.zeros((N, Hp, Wp, Kp - K), jnp.bfloat16))
        g = jnp.concatenate(taps, axis=-1).reshape(R, Kp)
        if Rp > R:
            g = jnp.concatenate([g, jnp.zeros((Rp - R, Kp), jnp.bfloat16)], axis=0)
        return g

    patches = jnp.stack([pool_group(py, px) for py in range(2) for px in range(2)], axis=0)

    w2 = jnp.transpose(w, (2, 3, 1, 0)).reshape(K, Cout)                     # (K, Cout)
    w2 = jnp.pad(w2, ((0, Kp - K), (0, Coutp - Cout))).astype(jnp.bfloat16)  # (Kp, Coutp)

    # ---------- pass 1: conv matmul + bf16 conv cache + per-channel batch statistics ----------
    p_spec = pl.BlockSpec((4, TR, Kp), lambda c, r: (0, c * nr_half + r, 0))
    w_spec = pl.BlockSpec((Kp, Coutp), lambda c, r: (0, 0))
    conv_spec = pl.BlockSpec((4, TR, Coutp), lambda c, r: (0, c * nr_half + r, 0))
    acc_spec = pl.BlockSpec((1, 1, Coutp), lambda c, r: (c, 0, 0))

    conv_cache, s2, sq2 = pl.pallas_call(
        _stats_kernel,
        out_shape=(jax.ShapeDtypeStruct((4, Rp, Coutp), jnp.bfloat16),
                   jax.ShapeDtypeStruct((2, 1, Coutp), jnp.float32),
                   jax.ShapeDtypeStruct((2, 1, Coutp), jnp.float32)),
        grid=(2, nr_half),
        in_specs=[p_spec, w_spec],
        out_specs=(conv_spec, acc_spec, acc_spec),
        compiler_params=pltpu.CompilerParams(
            dimension_semantics=("parallel", "arbitrary"),
            vmem_limit_bytes=vmem_limit),
    )(patches, w2)

    # zero-padded rows/channels contribute nothing; count uses only the N*Ho*Wo real outputs
    count = jnp.float32(4 * R)
    s = jnp.sum(s2[:, 0, :Cout], axis=0)
    sq = jnp.sum(sq2[:, 0, :Cout], axis=0)
    mean = s / count
    # TODO(synk): E[X^2]-E[X]^2 can cancel for strongly offset activations; fine here (zero-mean conv)
    var = jnp.maximum(sq / count - mean * mean, 0.0)
    scale = gamma.astype(jnp.float32) * lax.rsqrt(var + BN_EPS)
    shift = beta.astype(jnp.float32) - mean * scale
    scale_p = jnp.pad(scale, (0, Coutp - Cout)).reshape(1, Coutp)
    shift_p = jnp.pad(shift, (0, Coutp - Cout)).reshape(1, Coutp)

    # ---------- pass 2: fused BN + ReLU + 2x2 max-pool over the conv cache (no matmul) ----------
    out = pl.pallas_call(
        _apply_kernel,
        out_shape=jax.ShapeDtypeStruct((Rp, Coutp), jnp.bfloat16),
        grid=(nr,),
        in_specs=[pl.BlockSpec((4, TR, Coutp), lambda r: (0, r, 0)),
                  pl.BlockSpec((1, Coutp), lambda r: (0, 0)),
                  pl.BlockSpec((1, Coutp), lambda r: (0, 0))],
        out_specs=pl.BlockSpec((TR, Coutp), lambda r: (r, 0)),
        compiler_params=pltpu.CompilerParams(
            dimension_semantics=("parallel",),
            vmem_limit_bytes=vmem_limit),
    )(conv_cache, scale_p, shift_p)

    out = out[:R, :Cout].astype(jnp.float32).reshape(N, Hp, Wp, Cout)
    return jnp.transpose(out, (0, 3, 1, 2))                                  # NCHW f32


def reference(x, w, b, gamma, beta, padding=0):
    """Pure-JAX f32 reference matching PyTorch semantics (training-mode BN, with conv bias)."""
    conv = lax.conv_general_dilated(
        x, w, window_strides=(1, 1), padding=[(padding, padding)] * 2,
        dimension_numbers=("NCHW", "OIHW", "NCHW"))
    conv = conv + b[None, :, None, None]
    mean = jnp.mean(conv, axis=(0, 2, 3), keepdims=True)
    var = jnp.mean((conv - mean) ** 2, axis=(0, 2, 3), keepdims=True)
    bn = (conv - mean) * lax.rsqrt(var + BN_EPS)
    bn = bn * gamma[None, :, None, None] + beta[None, :, None, None]
    act = jnp.maximum(bn, 0.0)
    N, C, Ho, Wo = act.shape
    act = act[:, :, : (Ho // 2) * 2, : (Wo // 2) * 2]
    return act.reshape(N, C, Ho // 2, 2, Wo // 2, 2).max(axis=(3, 5))


def _check(name, x, w, b, gamma, beta, padding, row_tile=None):
    out = jax.block_until_ready(
        relation_conv_block(x, w, b, gamma, beta, padding=padding, row_tile=row_tile))
    ref = reference(x, w, b, gamma, beta, padding=padding)
    assert out.shape == ref.shape, (name, out.shape, ref.shape)
    # tolerance covers bf16 matmul operands, bf16 conv cache and bf16 output storage
    # (BN statistics and the BN/ReLU/pool math itself are f32)
    if not bool(jnp.allclose(out, ref, atol=4e-2, rtol=4e-2)):
        err = float(jnp.max(jnp.abs(out - ref)))
        raise AssertionError(f"{name}: Pallas output does not match reference (max err {err:.4f})")


if __name__ == "__main__":
    key = jax.random.PRNGKey(0)
    k1, k2, k3, k4, k5 = jax.random.split(key, 5)

    # small case from the module spec: x (2, 4, 16, 16), padding=0, BN init gamma=1 / beta=0
    N, Cin, Cout, H = 2, 4, 8, 16
    x = jax.random.normal(k1, (N, Cin, H, H), dtype=jnp.float32)
    w = 0.1 * jax.random.normal(k2, (Cout, Cin, 3, 3), dtype=jnp.float32)
    b = 0.1 * jax.random.normal(k3, (Cout,), dtype=jnp.float32)
    gamma = jnp.ones((Cout,), dtype=jnp.float32)
    beta = jnp.zeros((Cout,), dtype=jnp.float32)
    _check("small", x, w, b, gamma, beta, padding=0)

    # multi-tile case: exercises multi-step 'arbitrary' accumulation, the 2-way core split with
    # real data on both halves, padding=1, Cout not a multiple of 128, and affine BN params.
    N2, Cin2, Cout2, H2 = 8, 8, 16, 18
    x2 = jax.random.normal(k4, (N2, Cin2, H2, H2), dtype=jnp.float32)
    kk1, kk2, kk3, kk4 = jax.random.split(k5, 4)
    w_big = 0.1 * jax.random.normal(kk1, (Cout2, Cin2, 3, 3), dtype=jnp.float32)
    b_big = 0.1 * jax.random.normal(kk2, (Cout2,), dtype=jnp.float32)
    gamma_big = 1.0 + 0.1 * jax.random.normal(kk3, (Cout2,), dtype=jnp.float32)
    beta_big = 0.1 * jax.random.normal(kk4, (Cout2,), dtype=jnp.float32)
    _check("multi-tile", x2, w_big, b_big, gamma_big, beta_big, padding=1, row_tile=256)

    print("KERNEL_OK")
</pallas_src>

<mosaic_0001>
module attributes {stable_mosaic.version = 11 : i64} {
  func.func @_stats_kernel(%arg0: i32, %arg1: i32, %arg2: memref<4x256x128xbf16, #tpu.memory_space<vmem>>, %arg3: memref<128x128xbf16, #tpu.memory_space<vmem>>, %arg4: memref<4x256x128xbf16, #tpu.memory_space<vmem>>, %arg5: memref<1x1x128xf32, #tpu.memory_space<vmem>>, %arg6: memref<1x1x128xf32, #tpu.memory_space<vmem>>) attributes {dimension_semantics = [#tpu.dimension_semantics<parallel>, #tpu.dimension_semantics<arbitrary>], iteration_bounds = array<i64: 2, 1>, scalar_prefetch = 0 : i64, scratch_operands = 0 : i64, tpu.core_type = #tpu.core_type<tc>, window_params = [{transform_indices = @transform_0, window_bounds = array<i64: 4, 256, 128>}, {pipeline_mode = #tpu.pipeline_mode<synchronous>, transform_indices = @transform_1, window_bounds = array<i64: 128, 128>}, {transform_indices = @transform_2, window_bounds = array<i64: 4, 256, 128>}, {transform_indices = @transform_3, window_bounds = array<i64: 1, 1, 128>}, {transform_indices = @transform_4, window_bounds = array<i64: 1, 1, 128>}]} {
    %c0_i32 = arith.constant 0 : i32
    %0 = arith.cmpi eq, %arg1, %c0_i32 : i32
    %1 = arith.extui %0 : i1 to i32
    %c0_i32_0 = arith.constant 0 : i32
    %2 = arith.cmpi ne, %1, %c0_i32_0 : i32
    scf.if %2 {
      %cst_87 = arith.constant 0.000000e+00 : f32
      %91 = vector.broadcast %cst_87 : f32 to vector<1x1x128xf32>
      %c0_88 = arith.constant 0 : index
      %c0_89 = arith.constant 0 : index
      %c0_90 = arith.constant 0 : index
      %92 = vector.load %arg5[%c0_88, %c0_89, %c0_90] : memref<1x1x128xf32, #tpu.memory_space<vmem>>, vector<1x1x128xf32>
      tpu.vector_store %arg5[%c0_88, %c0_89, %c0_90], %91 {strides = array<i32>} : memref<1x1x128xf32, #tpu.memory_space<vmem>>, vector<1x1x128xf32>,
      %cst_91 = arith.constant 0.000000e+00 : f32
      %93 = vector.broadcast %cst_91 : f32 to vector<1x1x128xf32>
      %c0_92 = arith.constant 0 : index
      %c0_93 = arith.constant 0 : index
      %c0_94 = arith.constant 0 : index
      %94 = vector.load %arg6[%c0_92, %c0_93, %c0_94] : memref<1x1x128xf32, #tpu.memory_space<vmem>>, vector<1x1x128xf32>
      tpu.vector_store %arg6[%c0_92, %c0_93, %c0_94], %93 {strides = array<i32>} : memref<1x1x128xf32, #tpu.memory_space<vmem>>, vector<1x1x128xf32>,
    } else {
    }
    %c0_i32_1 = arith.constant 0 : i32
    %c64_i32 = arith.constant 64 : i32
    %3 = arith.muli %c0_i32_1, %c64_i32 : i32
    %4 = tpu.assume_multiple %3, 64 : i32
    %c0 = arith.constant 0 : index
    %5 = arith.index_cast %4 : i32 to index
    %c0_2 = arith.constant 0 : index
    %6 = vector.load %arg2[%c0, %5, %c0_2] : memref<4x256x128xbf16, #tpu.memory_space<vmem>>, vector<4x64x128xbf16>
    %7 = vector.shape_cast %6 : vector<4x64x128xbf16> to vector<256x128xbf16>
    %c0_3 = arith.constant 0 : index
    %c0_4 = arith.constant 0 : index
    %8 = vector.load %arg3[%c0_3, %c0_4] : memref<128x128xbf16, #tpu.memory_space<vmem>>, vector<128x128xbf16>
    %cst = arith.constant dense<0.000000e+00> : vector<256x128xf32>
    %9 = tpu.matmul %7, %8, %cst {dimension_numbers = #tpu.dot_dimension_numbers<[1], [0], [0], [1], [0, 0, 1, 1], [], []>} : vector<256x128xbf16>, vector<128x128xbf16>, vector<256x128xf32> -> vector<256x128xf32>
    %10 = vector.shape_cast %9 : vector<256x128xf32> to vector<4x64x128xf32>
    %11 = arith.truncf %10 : vector<4x64x128xf32> to vector<4x64x128xbf16>
    %c0_5 = arith.constant 0 : index
    %12 = arith.index_cast %4 : i32 to index
    %c0_6 = arith.constant 0 : index
    %13 = vector.load %arg4[%c0_5, %12, %c0_6] : memref<4x256x128xbf16, #tpu.memory_space<vmem>>, vector<4x64x128xbf16>
    tpu.vector_store %arg4[%c0_5, %12, %c0_6], %11 {strides = array<i32>} : memref<4x256x128xbf16, #tpu.memory_space<vmem>>, vector<4x64x128xbf16>,
    %c0_7 = arith.constant 0 : index
    %c0_8 = arith.constant 0 : index
    %c0_9 = arith.constant 0 : index
    %14 = vector.load %arg5[%c0_7, %c0_8, %c0_9] : memref<1x1x128xf32, #tpu.memory_space<vmem>>, vector<1x1x128xf32>
    %cst_10 = arith.constant dense<0.000000e+00> : vector<128xf32>
    %15 = vector.multi_reduction <add>, %9, %cst_10 [0] : vector<256x128xf32> to vector<128xf32>
    %16 = vector.shape_cast %15 : vector<128xf32> to vector<1x1x128xf32>
    %17 = arith.addf %14, %16 : vector<1x1x128xf32>
    %c0_11 = arith.constant 0 : index
    %c0_12 = arith.constant 0 : index
    %c0_13 = arith.constant 0 : index
    %18 = vector.load %arg5[%c0_11, %c0_12, %c0_13] : memref<1x1x128xf32, #tpu.memory_space<vmem>>, vector<1x1x128xf32>
    tpu.vector_store %arg5[%c0_11, %c0_12, %c0_13], %17 {strides = array<i32>} : memref<1x1x128xf32, #tpu.memory_space<vmem>>, vector<1x1x128xf32>,
    %c0_14 = arith.constant 0 : index
    %c0_15 = arith.constant 0 : index
    %c0_16 = arith.constant 0 : index
    %19 = vector.load %arg6[%c0_14, %c0_15, %c0_16] : memref<1x1x128xf32, #tpu.memory_space<vmem>>, vector<1x1x128xf32>
    %20 = arith.mulf %9, %9 : vector<256x128xf32>
    %cst_17 = arith.constant dense<0.000000e+00> : vector<128xf32>
    %21 = vector.multi_reduction <add>, %20, %cst_17 [0] : vector<256x128xf32> to vector<128xf32>
    %22 = vector.shape_cast %21 : vector<128xf32> to vector<1x1x128xf32>
    %23 = arith.addf %19, %22 : vector<1x1x128xf32>
    %c0_18 = arith.constant 0 : index
    %c0_19 = arith.constant 0 : index
    %c0_20 = arith.constant 0 : index
    %24 = vector.load %arg6[%c0_18, %c0_19, %c0_20] : memref<1x1x128xf32, #tpu.memory_space<vmem>>, vector<1x1x128xf32>
    tpu.vector_store %arg6[%c0_18, %c0_19, %c0_20], %23 {strides = array<i32>} : memref<1x1x128xf32, #tpu.memory_space<vmem>>, vector<1x1x128xf32>,
    %c1_i32 = arith.constant 1 : i32
    %c64_i32_21 = arith.constant 64 : i32
    %25 = arith.muli %c1_i32, %c64_i32_21 : i32
    %26 = tpu.assume_multiple %25, 64 : i32
    %c0_22 = arith.constant 0 : index
    %27 = arith.index_cast %26 : i32 to index
    %c0_23 = arith.constant 0 : index
    %28 = vector.load %arg2[%c0_22, %27, %c0_23] : memref<4x256x128xbf16, #tpu.memory_space<vmem>>, vector<4x64x128xbf16>
    %29 = vector.shape_cast %28 : vector<4x64x128xbf16> to vector<256x128xbf16>
    %c0_24 = arith.constant 0 : index
    %c0_25 = arith.constant 0 : index
    %30 = vector.load %arg3[%c0_24, %c0_25] : memref<128x128xbf16, #tpu.memory_space<vmem>>, vector<128x128xbf16>
    %cst_26 = arith.constant dense<0.000000e+00> : vector<256x128xf32>
    %31 = tpu.matmul %29, %30, %cst_26 {dimension_numbers = #tpu.dot_dimension_numbers<[1], [0], [0], [1], [0, 0, 1, 1], [], []>} : vector<256x128xbf16>, vector<128x128xbf16>, vector<256x128xf32> -> vector<256x128xf32>
    %32 = vector.shape_cast %31 : vector<256x128xf32> to vector<4x64x128xf32>
    %33 = arith.truncf %32 : vector<4x64x128xf32> to vector<4x64x128xbf16>
    %c0_27 = arith.constant 0 : index
    %34 = arith.index_cast %26 : i32 to index
    %c0_28 = arith.constant 0 : index
    %35 = vector.load %arg4[%c0_27, %34, %c0_28] : memref<4x256x128xbf16, #tpu.memory_space<vmem>>, vector<4x64x128xbf16>
    tpu.vector_store %arg4[%c0_27, %34, %c0_28], %33 {strides = array<i32>} : memref<4x256x128xbf16, #tpu.memory_space<vmem>>, vector<4x64x128xbf16>,
    %c0_29 = arith.constant 0 : index
    %c0_30 = arith.constant 0 : index
    %c0_31 = arith.constant 0 : index
    %36 = vector.load %arg5[%c0_29, %c0_30, %c0_31] : memref<1x1x128xf32, #tpu.memory_space<vmem>>, vector<1x1x128xf32>
    %cst_32 = arith.constant dense<0.000000e+00> : vector<128xf32>
    %37 = vector.multi_reduction <add>, %31, %cst_32 [0] : vector<256x128xf32> to vector<128xf32>
    %38 = vector.shape_cast %37 : vector<128xf32> to vector<1x1x128xf32>
    %39 = arith.addf %36, %38 : vector<1x1x128xf32>
    %c0_33 = arith.constant 0 : index
    %c0_34 = arith.constant 0 : index
    %c0_35 = arith.constant 0 : index
    %40 = vector.load %arg5[%c0_33, %c0_34, %c0_35] : memref<1x1x128xf32, #tpu.memory_space<vmem>>, vector<1x1x128xf32>
    tpu.vector_store %arg5[%c0_33, %c0_34, %c0_35], %39 {strides = array<i32>} : memref<1x1x128xf32, #tpu.memory_space<vmem>>, vector<1x1x128xf32>,
    %c0_36 = arith.constant 0 : index
    %c0_37 = arith.constant 0 : index
    %c0_38 = arith.constant 0 : index
    %41 = vector.load %arg6[%c0_36, %c0_37, %c0_38] : memref<1x1x128xf32, #tpu.memory_space<vmem>>, vector<1x1x128xf32>
    %42 = arith.mulf %31, %31 : vector<256x128xf32>
    %cst_39 = arith.constant dense<0.000000e+00> : vector<128xf32>
    %43 = vector.multi_reduction <add>, %42, %cst_39 [0] : vector<256x128xf32> to vector<128xf32>
    %44 = vector.shape_cast %43 : vector<128xf32> to vector<1x1x128xf32>
    %45 = arith.addf %41, %44 : vector<1x1x128xf32>
    %c0_40 = arith.constant 0 : index
    %c0_41 = arith.constant 0 : index
    %c0_42 = arith.constant 0 : index
    %46 = vector.load %arg6[%c0_40, %c0_41, %c0_42] : memref<1x1x128xf32, #tpu.memory_space<vmem>>, vector<1x1x128xf32>
    tpu.vector_store %arg6[%c0_40, %c0_41, %c0_42], %45 {strides = array<i32>} : memref<1x1x128xf32, #tpu.memory_space<vmem>>, vector<1x1x128xf32>,
    %c2_i32 = arith.constant 2 : i32
    %c64_i32_43 = arith.constant 64 : i32
    %47 = arith.muli %c2_i32, %c64_i32_43 : i32
    %48 = tpu.assume_multiple %47, 64 : i32
    %c0_44 = arith.constant 0 : index
    %49 = arith.index_cast %48 : i32 to index
    %c0_45 = arith.constant 0 : index
    %50 = vector.load %arg2[%c0_44, %49, %c0_45] : memref<4x256x128xbf16, #tpu.memory_space<vmem>>, vector<4x64x128xbf16>
    %51 = vector.shape_cast %50 : vector<4x64x128xbf16> to vector<256x128xbf16>
    %c0_46 = arith.constant 0 : index
    %c0_47 = arith.constant 0 : index
    %52 = vector.load %arg3[%c0_46, %c0_47] : memref<128x128xbf16, #tpu.memory_space<vmem>>, vector<128x128xbf16>
    %cst_48 = arith.constant dense<0.000000e+00> : vector<256x128xf32>
    %53 = tpu.matmul %51, %52, %cst_48 {dimension_numbers = #tpu.dot_dimension_numbers<[1], [0], [0], [1], [0, 0, 1, 1], [], []>} : vector<256x128xbf16>, vector<128x128xbf16>, vector<256x128xf32> -> vector<256x128xf32>
    %54 = vector.shape_cast %53 : vector<256x128xf32> to vector<4x64x128xf32>
    %55 = arith.truncf %54 : vector<4x64x128xf32> to vector<4x64x128xbf16>
    %c0_49 = arith.constant 0 : index
    %56 = arith.index_cast %48 : i32 to index
    %c0_50 = arith.constant 0 : index
    %57 = vector.load %arg4[%c0_49, %56, %c0_50] : memref<4x256x128xbf16, #tpu.memory_space<vmem>>, vector<4x64x128xbf16>
    tpu.vector_store %arg4[%c0_49, %56, %c0_50], %55 {strides = array<i32>} : memref<4x256x128xbf16, #tpu.memory_space<vmem>>, vector<4x64x128xbf16>,
    %c0_51 = arith.constant 0 : index
    %c0_52 = arith.constant 0 : index
    %c0_53 = arith.constant 0 : index
    %58 = vector.load %arg5[%c0_51, %c0_52, %c0_53] : memref<1x1x128xf32, #tpu.memory_space<vmem>>, vector<1x1x128xf32>
    %cst_54 = arith.constant dense<0.000000e+00> : vector<128xf32>
    %59 = vector.multi_reduction <add>, %53, %cst_54 [0] : vector<256x128xf32> to vector<128xf32>
    %60 = vector.shape_cast %59 : vector<128xf32> to vector<1x1x128xf32>
    %61 = arith.addf %58, %60 : vector<1x1x128xf32>
    %c0_55 = arith.constant 0 : index
    %c0_56 = arith.constant 0 : index
    %c0_57 = arith.constant 0 : index
    %62 = vector.load %arg5[%c0_55, %c0_56, %c0_57] : memref<1x1x128xf32, #tpu.memory_space<vmem>>, vector<1x1x128xf32>
    tpu.vector_store %arg5[%c0_55, %c0_56, %c0_57], %61 {strides = array<i32>} : memref<1x1x128xf32, #tpu.memory_space<vmem>>, vector<1x1x128xf32>,
    %c0_58 = arith.constant 0 : index
    %c0_59 = arith.constant 0 : index
    %c0_60 = arith.constant 0 : index
    %63 = vector.load %arg6[%c0_58, %c0_59, %c0_60] : memref<1x1x128xf32, #tpu.memory_space<vmem>>, vector<1x1x128xf32>
    %64 = arith.mulf %53, %53 : vector<256x128xf32>
    %cst_61 = arith.constant dense<0.000000e+00> : vector<128xf32>
    %65 = vector.multi_reduction <add>, %64, %cst_61 [0] : vector<256x128xf32> to vector<128xf32>
    %66 = vector.shape_cast %65 : vector<128xf32> to vector<1x1x128xf32>
    %67 = arith.addf %63, %66 : vector<1x1x128xf32>
    %c0_62 = arith.constant 0 : index
    %c0_63 = arith.constant 0 : index
    %c0_64 = arith.constant 0 : index
    %68 = vector.load %arg6[%c0_62, %c0_63, %c0_64] : memref<1x1x128xf32, #tpu.memory_space<vmem>>, vector<1x1x128xf32>
    tpu.vector_store %arg6[%c0_62, %c0_63, %c0_64], %67 {strides = array<i32>} : memref<1x1x128xf32, #tpu.memory_space<vmem>>, vector<1x1x128xf32>,
    %c3_i32 = arith.constant 3 : i32
    %c64_i32_65 = arith.constant 64 : i32
    %69 = arith.muli %c3_i32, %c64_i32_65 : i32
    %70 = tpu.assume_multiple %69, 64 : i32
    %c0_66 = arith.constant 0 : index
    %71 = arith.index_cast %70 : i32 to index
    %c0_67 = arith.constant 0 : index
    %72 = vector.load %arg2[%c0_66, %71, %c0_67] : memref<4x256x128xbf16, #tpu.memory_space<vmem>>, vector<4x64x128xbf16>
    %73 = vector.shape_cast %72 : vector<4x64x128xbf16> to vector<256x128xbf16>
    %c0_68 = arith.constant 0 : index
    %c0_69 = arith.constant 0 : index
    %74 = vector.load %arg3[%c0_68, %c0_69] : memref<128x128xbf16, #tpu.memory_space<vmem>>, vector<128x128xbf16>
    %cst_70 = arith.constant dense<0.000000e+00> : vector<256x128xf32>
    %75 = tpu.matmul %73, %74, %cst_70 {dimension_numbers = #tpu.dot_dimension_numbers<[1], [0], [0], [1], [0, 0, 1, 1], [], []>} : vector<256x128xbf16>, vector<128x128xbf16>, vector<256x128xf32> -> vector<256x128xf32>
    %76 = vector.shape_cast %75 : vector<256x128xf32> to vector<4x64x128xf32>
    %77 = arith.truncf %76 : vector<4x64x128xf32> to vector<4x64x128xbf16>
    %c0_71 = arith.constant 0 : index
    %78 = arith.index_cast %70 : i32 to index
    %c0_72 = arith.constant 0 : index
    %79 = vector.load %arg4[%c0_71, %78, %c0_72] : memref<4x256x128xbf16, #tpu.memory_space<vmem>>, vector<4x64x128xbf16>
    tpu.vector_store %arg4[%c0_71, %78, %c0_72], %77 {strides = array<i32>} : memref<4x256x128xbf16, #tpu.memory_space<vmem>>, vector<4x64x128xbf16>,
    %c0_73 = arith.constant 0 : index
    %c0_74 = arith.constant 0 : index
    %c0_75 = arith.constant 0 : index
    %80 = vector.load %arg5[%c0_73, %c0_74, %c0_75] : memref<1x1x128xf32, #tpu.memory_space<vmem>>, vector<1x1x128xf32>
    %cst_76 = arith.constant dense<0.000000e+00> : vector<128xf32>
    %81 = vector.multi_reduction <add>, %75, %cst_76 [0] : vector<256x128xf32> to vector<128xf32>
    %82 = vector.shape_cast %81 : vector<128xf32> to vector<1x1x128xf32>
    %83 = arith.addf %80, %82 : vector<1x1x128xf32>
    %c0_77 = arith.constant 0 : index
    %c0_78 = arith.constant 0 : index
    %c0_79 = arith.constant 0 : index
    %84 = vector.load %arg5[%c0_77, %c0_78, %c0_79] : memref<1x1x128xf32, #tpu.memory_space<vmem>>, vector<1x1x128xf32>
    tpu.vector_store %arg5[%c0_77, %c0_78, %c0_79], %83 {strides = array<i32>} : memref<1x1x128xf32, #tpu.memory_space<vmem>>, vector<1x1x128xf32>,
    %c0_80 = arith.constant 0 : index
    %c0_81 = arith.constant 0 : index
    %c0_82 = arith.constant 0 : index
    %85 = vector.load %arg6[%c0_80, %c0_81, %c0_82] : memref<1x1x128xf32, #tpu.memory_space<vmem>>, vector<1x1x128xf32>
    %86 = arith.mulf %75, %75 : vector<256x128xf32>
    %cst_83 = arith.constant dense<0.000000e+00> : vector<128xf32>
    %87 = vector.multi_reduction <add>, %86, %cst_83 [0] : vector<256x128xf32> to vector<128xf32>
    %88 = vector.shape_cast %87 : vector<128xf32> to vector<1x1x128xf32>
    %89 = arith.addf %85, %88 : vector<1x1x128xf32>
    %c0_84 = arith.constant 0 : index
    %c0_85 = arith.constant 0 : index
    %c0_86 = arith.constant 0 : index
    %90 = vector.load %arg6[%c0_84, %c0_85, %c0_86] : memref<1x1x128xf32, #tpu.memory_space<vmem>>, vector<1x1x128xf32>
    tpu.vector_store %arg6[%c0_84, %c0_85, %c0_86], %89 {strides = array<i32>} : memref<1x1x128xf32, #tpu.memory_space<vmem>>, vector<1x1x128xf32>,
    %c4_i32 = arith.constant 4 : i32
    return
  }
  func.func @transform_0(%arg0: i32, %arg1: i32) -> (i32, i32, i32) {
    %c1_i32 = arith.constant 1 : i32
    %0 = arith.muli %arg0, %c1_i32 : i32
    %1 = arith.addi %0, %arg1 : i32
    %c0_i32 = arith.constant 0 : i32
    %c0_i32_0 = arith.constant 0 : i32
    %c0_i32_1 = arith.constant 0 : i32
    return %c0_i32, %1, %c0_i32_0 : i32, i32, i32
  }
  func.func @transform_1(%arg0: i32, %arg1: i32) -> (i32, i32) {
    %c0_i32 = arith.constant 0 : i32
    %c0_i32_0 = arith.constant 0 : i32
    %c0_i32_1 = arith.constant 0 : i32
    return %c0_i32, %c0_i32_0 : i32, i32
  }
  func.func @transform_2(%arg0: i32, %arg1: i32) -> (i32, i32, i32) {
    %c1_i32 = arith.constant 1 : i32
    %0 = arith.muli %arg0, %c1_i32 : i32
    %1 = arith.addi %0, %arg1 : i32
    %c0_i32 = arith.constant 0 : i32
    %c0_i32_0 = arith.constant 0 : i32
    %c0_i32_1 = arith.constant 0 : i32
    return %c0_i32, %1, %c0_i32_0 : i32, i32, i32
  }
  func.func @transform_3(%arg0: i32, %arg1: i32) -> (i32, i32, i32) {
    %c0_i32 = arith.constant 0 : i32
    %c0_i32_0 = arith.constant 0 : i32
    %c0_i32_1 = arith.constant 0 : i32
    return %arg0, %c0_i32, %c0_i32_0 : i32, i32, i32
  }
  func.func @transform_4(%arg0: i32, %arg1: i32) -> (i32, i32, i32) {
    %c0_i32 = arith.constant 0 : i32
    %c0_i32_0 = arith.constant 0 : i32
    %c0_i32_1 = arith.constant 0 : i32
    return %arg0, %c0_i32, %c0_i32_0 : i32, i32, i32
  }
}

</mosaic_0001>

<llo_original>
// kernel: tpu_custom_call.1
$region0: #{tpu_custom_call.1}
  #allocation0 [shape = 'u32[]', space=smem, size = 0x4, offset = 0x4, fixed_abs, tag = 'smem constant byte address 0x4 - core index']
  #allocation1 [shape = 'u32[144,128]{1,0:T(1,128)}', space=vmem, size = 0x12000, scoped, tag = 'internal scratch']
  #allocation11 [shape = 's32[]', space=sflag, size = 0x4, offset = 0, fixed_abs, tag = 'sflag constant byte address 0x0 - dummy sync flag']
  #allocation13 [shape = 's32[]', space=sflag, size = 0x4, offset = 0, fixed_abs, tag = 'sflag constant byte address 0x0 - dummy sync flag']
  %s0 = inlined_call_operand.hbm [shape: bf16[4,512,128], index: 0, kind: input, shape index: {}]
  %s1 = inlined_call_operand.hbm [shape: bf16[128,128], index: 1, kind: input, shape index: {}]
  %s2 = inlined_call_operand.hbm [shape: bf16[4,512,128], index: 2, kind: output, shape index: {0}]
  %s3 = inlined_call_operand.hbm [shape: f32[2,1,128], index: 3, kind: output, shape index: {1}]
  %s4 = inlined_call_operand.hbm [shape: f32[2,1,128], index: 4, kind: output, shape index: {2}]
  %5 = xla_tuple %s2, %s3, %s4
  %s6 = sld [smem:[#allocation0]]
  $region69: #{tpu_custom_call.1} parent=0
    _
  %s8 = ssub.s32 1, %s6
  %s9 = scalar_select 0, %s8, %s6
  $region1: #{tpu_custom_call.1} parent=0
    #allocation2 [shape = 'u8[524288]{0}', space=vmem, size = 0x80000, scoped, tag = 'input window, operand 0']
    #allocation3 [shape = 's32[2]{0}', space=sflag, size = 0x8, scoped, tag = 'scoped memory for tpu_custom_call.1']
    #allocation4 [shape = 's32[2]{0}', space=sflag, size = 0x8, scoped, tag = 'scoped memory for tpu_custom_call.1']
    #allocation5 [shape = 'u8[32768]{0}', space=vmem, size = 0x8000, scoped, tag = 'input window, operand 1, single buffered']
    #allocation6 [shape = 's32[1]{0}', space=sflag, size = 0x4, scoped, tag = 'scoped memory for tpu_custom_call.1']
    #allocation7 [shape = 'u8[524288]{0}', space=vmem, size = 0x80000, scoped, tag = 'output window, operand 0']
    #allocation8 [shape = 'u8[1024]{0}', space=vmem, size = 0x400, scoped, tag = 'output window, operand 1']
    #allocation9 [shape = 's32[2]{0}', space=sflag, size = 0x8, scoped, tag = 'scoped memory for tpu_custom_call.1']
    #allocation10 [shape = 'u8[1024]{0}', space=vmem, size = 0x400, scoped, tag = 'output window, operand 2']
    %10 = vsyncpa [#allocation3], 0
    %s11 = scalar_lea.sflag [#allocation3], 1
    %12 = vsyncpa %s11, 0
    %13 = vsyncpa [#allocation6], 0
    %14 = vsyncpa [#allocation4], 0
    %s15 = scalar_lea.sflag [#allocation4], 1
    %16 = vsyncpa %s15, 0
    %17 = vsyncpa [#allocation9], 0
    %s18 = scalar_lea.sflag [#allocation9], 1
    %19 = vsyncpa %s18, 0
    loop: start=0, step=1, limit=4
    $region2: #{tpu_custom_call.1} parent=1 // loop_pre_header
      _
    $region3: #{tpu_custom_call.1} parent=1 // loop_header
      %s21 = sphi 0, %s25
      %p22 = scmp.ge.s32.totalorder %s21, 4
      %s28 = sphi 0, %s40
      %s29 = sphi 0, %s36
      %s30 = sphi 0, %s28
      %s31 = sphi 0, %s29
      %s32 = sphi 0, %s30
      %s33 = sphi 0, %s31
      %s45 = sphi 0, %s47
      %s48 = sphi 0, %s45
      %s49 = sphi 0, %s48
      %s65 = sphi 0, %s49
      %s69 = sphi 0, %s69
      %s71 = sphi 0, %s69
      %s72 = sphi 0, %s71
      %s86 = sphi 0, %s72
      %s94 = sphi 0, %s96
      %s97 = sphi 0, %s94
      %s98 = sphi 0, %s97
      %s114 = sphi 0, %s98
      %s120 = sphi 0, %s122
      %s123 = sphi 0, %s120
      %s124 = sphi 0, %s123
      %s140 = sphi 0, %s124
      %s146 = sphi 0, %s148
      %s149 = sphi 0, %s146
      %s150 = sphi 0, %s149
      %s166 = sphi 0, %s150
    $region4: #{tpu_custom_call.1} parent=1 // loop_header_branch
      %24 = sbr.rel (%p22) target = $region8
    $region5: #{tpu_custom_call.1} parent=1 // loop_body
      %s26 = ssub.s32 %s21, 1
      %s27 = ssub.s32 %s21, 2
      %s34 = sadd.s32 1, %s29
      %p35 = scmp.ge.s32.totalorder %s34, 1
      %s36 = scalar_select %p35, 0, %s34
      %s37 = sadd.s32 1, %s28
      %s38 = scalar_select %p35, %s37, %s28
      %p39 = scmp.ge.s32.totalorder %s38, 2
      %s40 = scalar_select %p39, 0, %s38
      %s41 = sadd.s32 %s28, %s29
      %s42 = sadd.s32 %s40, %s36
      %s43 = ssub.s32 %s41, %s42
      %p44 = scmp.eq.s32.totalorder %s43, 0
      %s46 = sadd.s32 %s45, 1
      %s47 = scalar_select %p44, %s45, %s46
      %p50 = pneg %p44
      %p51 = scmp.eq.s32.totalorder %s21, 1
      %p52 = por %p50, %p51
      %p53 = scmp.ne.s32.totalorder %s45, %s48
      %p54 = scmp.eq.s32.totalorder %s21, 0
      %p55 = por %p53, %p54
      %p56 = scmp.ne.s32.totalorder %s45, %s48
      %p57 = scmp.eq.s32.totalorder %s26, 1
      %p58 = por %p56, %p57
      %p59 = scmp.ne.s32.totalorder %s48, %s49
      %p60 = scmp.eq.s32.totalorder %s26, 0
      %p61 = por %p59, %p60
      %p62 = scmp.ne.s32.totalorder %s48, %s49
      %p63 = scmp.eq.s32.totalorder %s27, 1
      %p64 = por %p62, %p63
      %p66 = scmp.ne.s32.totalorder %s49, %s65
      %p67 = scmp.eq.s32.totalorder %s27, 0
      %p68 = por %p66, %p67
      %s70 = sadd.s32 %s69, 1
      %p73 = scmp.eq.s32.totalorder %s21, 1
      %p74 = scmp.ne.s32.totalorder %s69, %s71
      %p75 = scmp.eq.s32.totalorder %s21, 0
      %p76 = por %p74, %p75
      %p77 = scmp.ne.s32.totalorder %s69, %s71
      %p78 = scmp.eq.s32.totalorder %s26, 1
      %p79 = por %p77, %p78
      %p80 = scmp.ne.s32.totalorder %s71, %s72
      %p81 = scmp.eq.s32.totalorder %s26, 0
      %p82 = por %p80, %p81
      %p83 = scmp.ne.s32.totalorder %s71, %s72
      %p84 = scmp.eq.s32.totalorder %s27, 1
      %p85 = por %p83, %p84
      %p87 = scmp.ne.s32.totalorder %s72, %s86
      %p88 = scmp.eq.s32.totalorder %s27, 0
      %p89 = por %p87, %p88
      %s90 = sadd.s32 %s28, %s29
      %s91 = sadd.s32 %s40, %s36
      %s92 = ssub.s32 %s90, %s91
      %p93 = scmp.eq.s32.totalorder %s92, 0
      %s95 = sadd.s32 %s94, 1
      %s96 = scalar_select %p93, %s94, %s95
      %p99 = pneg %p93
      %p100 = scmp.eq.s32.totalorder %s21, 1
      %p101 = por %p99, %p100
      %p102 = scmp.ne.s32.totalorder %s94, %s97
      %p103 = scmp.eq.s32.totalorder %s21, 0
      %p104 = por %p102, %p103
      %p105 = scmp.ne.s32.totalorder %s94, %s97
      %p106 = scmp.eq.s32.totalorder %s26, 1
      %p107 = por %p105, %p106
      %p108 = scmp.ne.s32.totalorder %s97, %s98
      %p109 = scmp.eq.s32.totalorder %s26, 0
      %p110 = por %p108, %p109
      %p111 = scmp.ne.s32.totalorder %s97, %s98
      %p112 = scmp.eq.s32.totalorder %s27, 1
      %p113 = por %p111, %p112
      %p115 = scmp.ne.s32.totalorder %s98, %s114
      %p116 = scmp.eq.s32.totalorder %s27, 0
      %p117 = por %p115, %p116
      %s118 = ssub.s32 %s28, %s40
      %p119 = scmp.eq.s32.totalorder %s118, 0
      %s121 = sadd.s32 %s120, 1
      %s122 = scalar_select %p119, %s120, %s121
      %p125 = pneg %p119
      %p126 = scmp.eq.s32.totalorder %s21, 1
      %p127 = por %p125, %p126
      %p128 = scmp.ne.s32.totalorder %s120, %s123
      %p129 = scmp.eq.s32.totalorder %s21, 0
      %p130 = por %p128, %p129
      %p131 = scmp.ne.s32.totalorder %s120, %s123
      %p132 = scmp.eq.s32.totalorder %s26, 1
      %p133 = por %p131, %p132
      %p134 = scmp.ne.s32.totalorder %s123, %s124
      %p135 = scmp.eq.s32.totalorder %s26, 0
      %p136 = por %p134, %p135
      %p137 = scmp.ne.s32.totalorder %s123, %s124
      %p138 = scmp.eq.s32.totalorder %s27, 1
      %p139 = por %p137, %p138
      %p141 = scmp.ne.s32.totalorder %s124, %s140
      %p142 = scmp.eq.s32.totalorder %s27, 0
      %p143 = por %p141, %p142
      %s144 = ssub.s32 %s28, %s40
      %p145 = scmp.eq.s32.totalorder %s144, 0
      %s147 = sadd.s32 %s146, 1
      %s148 = scalar_select %p145, %s146, %s147
      %p151 = pneg %p145
      %p152 = scmp.eq.s32.totalorder %s21, 1
      %p153 = por %p151, %p152
      %p154 = scmp.ne.s32.totalorder %s146, %s149
      %p155 = scmp.eq.s32.totalorder %s21, 0
      %p156 = por %p154, %p155
      %p157 = scmp.ne.s32.totalorder %s146, %s149
      %p158 = scmp.eq.s32.totalorder %s26, 1
      %p159 = por %p157, %p158
      %p160 = scmp.ne.s32.totalorder %s149, %s150
      %p161 = scmp.eq.s32.totalorder %s26, 0
      %p162 = por %p160, %p161
      %p163 = scmp.ne.s32.totalorder %s149, %s150
      %p164 = scmp.eq.s32.totalorder %s27, 1
      %p165 = por %p163, %p164
      %p167 = scmp.ne.s32.totalorder %s150, %s166
      %p168 = scmp.eq.s32.totalorder %s27, 0
      %p169 = por %p167, %p168
      %p170 = scmp.le.s32.totalorder 1, %s21
      %p171 = scmp.lt.s32.totalorder %s21, 3
      %p172 = pnand %p170, %p171
      %p173 = pneg %p172
      // Predicated region
      $region9: #{tpu_custom_call.1} parent=5 // pred_check
        _
      $region10: #{tpu_custom_call.1} parent=5 // pred_check_branch
        %175 = sbr.rel (%p172) target = $region12
      $region11: #{tpu_custom_call.1} parent=5 // pred_region
        %s176 = ssub.s32 %s21, 1
        // Predicated region
        $region13: #{tpu_custom_call.1} parent=11 // pred_check
          %p177 = pneg %p82
        $region14: #{tpu_custom_call.1} parent=11 // pred_check_branch
          %179 = sbr.rel (%p177) target = $region16
        $region15: #{tpu_custom_call.1} parent=11 // pred_region
          %s181 = ssub.s32 1024, 1024
          %182 = vsyncadd [#allocation6], %s181
          %s183 = sshll.u32 [#allocation5], 4
          %s184 = int_to_ptr.vmem [resolvable:$true] %s183
          %189 = dma.hbm_to_vmem [thread:$0]  %s1, 1024, %s184, [#allocation6], 64, 64, 4
        $region16: #{tpu_custom_call.1} parent=11 // pred_fallthru
          _
      $region12: #{tpu_custom_call.1} parent=5 // pred_fallthru
        _
      %p190 = scmp.lt.s32.totalorder %s21, 2
      // Predicated region
      $region17: #{tpu_custom_call.1} parent=5 // pred_check
        %p191 = pneg %p190
      $region18: #{tpu_custom_call.1} parent=5 // pred_check_branch
        %193 = sbr.rel (%p191) target = $region20
      $region19: #{tpu_custom_call.1} parent=5 // pred_region
        // Predicated region
        $region21: #{tpu_custom_call.1} parent=19 // pred_check
          %p194 = pneg %p55
        $region22: #{tpu_custom_call.1} parent=19 // pred_check_branch
          %196 = sbr.rel (%p194) target = $region24
        $region23: #{tpu_custom_call.1} parent=19 // pred_region
          #allocation12 [shape = 'u32[6]{0}', space=smem, size = 0x18, scoped, tag = 'DMA stride descriptor']
          %s197 = sand.u32 %s45, 1
          %s198 = scalar_lea.sflag [#allocation3], %s197
          %s199 = sand.u32 %s45, 1
          %s200 = smul.addr %s199, 512
          %s201 = scalar_lea.vmem [#allocation2], %s200
          %s202 = sadd.s32 %s28, %s29
          %s203 = smul.u32 32, %s202
          %s205 = ssub.s32 8192, 8192
          %206 = vsyncadd %s198, %s205
          %s207 = smul.addr %s203, 64
          %s208 = scalar_lea.hbm %s0, %s207
          %s210 = sshll.u32 1, 14
          %s211 = sxor.u32 4294967295, %s210
          %s213 = sld [smem:[#allocation0]]
          %s214 = sadd.s32 2, %s213
          %s216 = sshll.u32 7, 26
          %s217 = sxor.u32 4294967295, %s216
          %s218 = sand.u32 0, %s217
          %s219 = sshll.u32 %s214, 26
          %s220 = sor.u32 %s218, %s219
          %s221 = sshll.u32 %s201, 4
          %s222 = int_to_ptr.vmem [resolvable:$true] %s221
          %228 = sst [smem:[#allocation12]] 4096
          %s229 = scalar_lea.smem [#allocation12], 1
          %230 = sst [smem:[%s229]] 2048
          %s231 = scalar_lea.smem [#allocation12], 2
          %232 = sst [smem:[%s231]] 32
          %s233 = scalar_lea.smem [#allocation12], 3
          %234 = sst [smem:[%s233]] 64
          %s235 = scalar_lea.smem [#allocation12], 4
          %236 = sst [smem:[%s235]] 64
          %s237 = scalar_lea.smem [#allocation12], 5
          %238 = sst [smem:[%s237]] 4
          %240 = dma.general %s208, 8192, %s222, %s198, [#allocation11], [#allocation12], %s220, 0
        $region24: #{tpu_custom_call.1} parent=19 // pred_fallthru
          _
      $region20: #{tpu_custom_call.1} parent=5 // pred_fallthru
        _
      %p241 = scmp.le.s32.totalorder 1, %s21
      %p242 = scmp.lt.s32.totalorder %s21, 3
      %p243 = pnand %p241, %p242
      %p244 = pneg %p243
      // Predicated region
      $region25: #{tpu_custom_call.1} parent=5 // pred_check
        _
      $region26: #{tpu_custom_call.1} parent=5 // pred_check_branch
        %246 = sbr.rel (%p243) target = $region28
      $region27: #{tpu_custom_call.1} parent=5 // pred_region
        %s247 = ssub.s32 %s21, 1
        %s248 = sand.u32 %s48, 1
        %s249 = scalar_lea.sflag [#allocation3], %s248
        %s250 = sand.u32 %s48, 1
        %s251 = smul.addr %s250, 512
        %s252 = scalar_lea.vmem [#allocation2], %s251
        // Predicated region
        $region29: #{tpu_custom_call.1} parent=27 // pred_check
          %p253 = pneg %p61
        $region30: #{tpu_custom_call.1} parent=27 // pred_check_branch
          %255 = sbr.rel (%p253) target = $region32
        $region31: #{tpu_custom_call.1} parent=27 // pred_region
          %256 = dma.done %s249, 8192
        $region32: #{tpu_custom_call.1} parent=27 // pred_fallthru
          _
        // Predicated region
        $region33: #{tpu_custom_call.1} parent=27 // pred_check
          %p257 = pneg %p82
        $region34: #{tpu_custom_call.1} parent=27 // pred_check_branch
          %259 = sbr.rel (%p257) target = $region36
        $region35: #{tpu_custom_call.1} parent=27 // pred_region
          %260 = dma.done [#allocation6], 1024
        $region36: #{tpu_custom_call.1} parent=27 // pred_fallthru
          _
        %s261 = sand.u32 %s48, 1
        %s262 = scalar_lea.sflag [#allocation3], %s261
        %s263 = sand.u32 %s48, 1
        %s264 = smul.addr %s263, 512
        %s265 = scalar_lea.vmem [#allocation2], %s264
        %p266 = pneg %p61
        %p267 = pneg %p58
        %p268 = pneg %p82
        %p269 = pneg %p79
        %p270 = pneg %p110
        %p271 = pneg %p107
        %s272 = sand.u32 %s97, 1
        %s273 = scalar_lea.sflag [#allocation4], %s272
        %s274 = sand.u32 %s97, 1
        %s275 = smul.addr %s274, 512
        %s276 = scalar_lea.vmem [#allocation7], %s275
        %p277 = pneg %p136
        %p278 = pneg %p133
        %s279 = sand.u32 %s26, 1
        %s280 = scalar_lea.sflag [#allocation9], %s279
        %s281 = sand.u32 %s123, 1
        %s282 = scalar_lea.vmem [#allocation8], %s281
        %p283 = pneg %p162
        %p284 = pneg %p159
        %s285 = sand.u32 %s26, 1
        %s286 = scalar_lea.sflag [#allocation9], %s285
        %s287 = sand.u32 %s149, 1
        %s288 = scalar_lea.vmem [#allocation10], %s287
        %s289 = sadd.s32 %s30, %s31
        %s290 = smul.u32 32, %s289
        %s291 = sadd.s32 %s30, %s31
        %s292 = smul.u32 32, %s291
        %p294 = scmp.eq.s32.totalorder %s31, 0
        // Predicated region
        $region37: #{tpu_custom_call.1} parent=27 // pred_check
          %p295 = pneg %p294
        $region38: #{tpu_custom_call.1} parent=27 // pred_check_branch
          %297 = sbr.rel (%p295) target = $region40
        $region39: #{tpu_custom_call.1} parent=27 // pred_region
          %298 = vst [vmem:[%s282] sm:$0x1] 0.0
          %299 = vst [vmem:[%s288] sm:$0x1] 0.0
        $region40: #{tpu_custom_call.1} parent=27 // pred_fallthru
          _
        %v300 = vld [vmem:[%s252] sm:$0xf]
        %v301 = vld [vmem:[%s252 + $0x4] sm:$0xf]
        %v302 = vld [vmem:[%s252 + $0x8] sm:$0xf]
        %v303 = vld [vmem:[%s252 + $0xc] sm:$0xf]
        %v304 = vld [vmem:[%s252 + $0x10] sm:$0xf]
        %v305 = vld [vmem:[%s252 + $0x14] sm:$0xf]
        %v306 = vld [vmem:[%s252 + $0x18] sm:$0xf]
        %v307 = vld [vmem:[%s252 + $0x1c] sm:$0xf]
        %v308 = vld [vmem:[%s252 + $0x80] sm:$0xf]
        %v309 = vld [vmem:[%s252 + $0x84] sm:$0xf]
        %v310 = vld [vmem:[%s252 + $0x88] sm:$0xf]
        %v311 = vld [vmem:[%s252 + $0x8c] sm:$0xf]
        %v312 = vld [vmem:[%s252 + $0x90] sm:$0xf]
        %v313 = vld [vmem:[%s252 + $0x94] sm:$0xf]
        %v314 = vld [vmem:[%s252 + $0x98] sm:$0xf]
        %v315 = vld [vmem:[%s252 + $0x9c] sm:$0xf]
        %v316 = vld [vmem:[%s252 + $0x100] sm:$0xf]
        %v317 = vld [vmem:[%s252 + $0x104] sm:$0xf]
        %v318 = vld [vmem:[%s252 + $0x108] sm:$0xf]
        %v319 = vld [vmem:[%s252 + $0x10c] sm:$0xf]
        %v320 = vld [vmem:[%s252 + $0x110] sm:$0xf]
        %v321 = vld [vmem:[%s252 + $0x114] sm:$0xf]
        %v322 = vld [vmem:[%s252 + $0x118] sm:$0xf]
        %v323 = vld [vmem:[%s252 + $0x11c] sm:$0xf]
        %v324 = vld [vmem:[%s252 + $0x180] sm:$0xf]
        %v325 = vld [vmem:[%s252 + $0x184] sm:$0xf]
        %v326 = vld [vmem:[%s252 + $0x188] sm:$0xf]
        %v327 = vld [vmem:[%s252 + $0x18c] sm:$0xf]
        %v328 = vld [vmem:[%s252 + $0x190] sm:$0xf]
        %v329 = vld [vmem:[%s252 + $0x194] sm:$0xf]
        %v330 = vld [vmem:[%s252 + $0x198] sm:$0xf]
        %v331 = vld [vmem:[%s252 + $0x19c] sm:$0xf]
        %v332 = vld [vmem:[#allocation5] sm:$0xf]
        %v333 = vld [vmem:[#allocation5 + $0x4] sm:$0xf]
        %v334 = vld [vmem:[#allocation5 + $0x8] sm:$0xf]
        %v335 = vld [vmem:[#allocation5 + $0xc] sm:$0xf]
        %v336 = vld [vmem:[#allocation5 + $0x10] sm:$0xf]
        %v337 = vld [vmem:[#allocation5 + $0x14] sm:$0xf]
        %v338 = vld [vmem:[#allocation5 + $0x18] sm:$0xf]
        %v339 = vld [vmem:[#allocation5 + $0x1c] sm:$0xf]
        %v340 = vld [vmem:[#allocation5 + $0x20] sm:$0xf]
        %v341 = vld [vmem:[#allocation5 + $0x24] sm:$0xf]
        %v342 = vld [vmem:[#allocation5 + $0x28] sm:$0xf]
        %v343 = vld [vmem:[#allocation5 + $0x2c] sm:$0xf]
        %v344 = vld [vmem:[#allocation5 + $0x30] sm:$0xf]
        %v345 = vld [vmem:[#allocation5 + $0x34] sm:$0xf]
        %v346 = vld [vmem:[#allocation5 + $0x38] sm:$0xf]
        %v347 = vld [vmem:[#allocation5 + $0x3c] sm:$0xf]
        %v380 = vunpack.c.l.b16 %v300
        %v381 = vunpack.c.l.b16 %v301
        %v382 = vunpack.c.l.b16 %v302
        %v383 = vunpack.c.l.b16 %v303
        %v384 = vunpack.c.l.b16 %v304
        %v385 = vunpack.c.l.b16 %v305
        %v386 = vunpack.c.l.b16 %v306
        %v387 = vunpack.c.l.b16 %v307
        %v388 = vunpack.c.l.b16 %v308
        %v389 = vunpack.c.l.b16 %v309
        %v390 = vunpack.c.l.b16 %v310
        %v391 = vunpack.c.l.b16 %v311
        %v392 = vunpack.c.l.b16 %v312
        %v393 = vunpack.c.l.b16 %v313
        %v394 = vunpack.c.l.b16 %v314
        %v395 = vunpack.c.l.b16 %v315
        %v396 = vunpack.c.l.b16 %v316
        %v397 = vunpack.c.l.b16 %v317
        %v398 = vunpack.c.l.b16 %v318
        %v399 = vunpack.c.l.b16 %v319
        %v400 = vunpack.c.l.b16 %v320
        %v401 = vunpack.c.l.b16 %v321
        %v402 = vunpack.c.l.b16 %v322
        %v403 = vunpack.c.l.b16 %v323
        %v404 = vunpack.c.l.b16 %v324
        %v405 = vunpack.c.l.b16 %v325
        %v406 = vunpack.c.l.b16 %v326
        %v407 = vunpack.c.l.b16 %v327
        %v408 = vunpack.c.l.b16 %v328
        %v409 = vunpack.c.l.b16 %v329
        %v410 = vunpack.c.l.b16 %v330
        %v411 = vunpack.c.l.b16 %v331
        %v412 = vpack.c.b16 %v381, %v380
        %v413 = vpack.c.b16 %v383, %v382
        %v414 = vpack.c.b16 %v385, %v384
        %v415 = vpack.c.b16 %v387, %v386
        %v416 = vpack.c.b16 %v389, %v388
        %v417 = vpack.c.b16 %v391, %v390
        %v418 = vpack.c.b16 %v393, %v392
        %v419 = vpack.c.b16 %v395, %v394
        %v420 = vpack.c.b16 %v397, %v396
        %v421 = vpack.c.b16 %v399, %v398
        %v422 = vpack.c.b16 %v401, %v400
        %v423 = vpack.c.b16 %v403, %v402
        %v424 = vpack.c.b16 %v405, %v404
        %v425 = vpack.c.b16 %v407, %v406
        %v426 = vpack.c.b16 %v409, %v408
        %v427 = vpack.c.b16 %v411, %v410
        %v460 = vunpack.c.l.b16 %v332
        %v461 = vunpack.c.l.b16 %v333
        %v462 = vunpack.c.l.b16 %v334
        %v463 = vunpack.c.l.b16 %v335
        %v464 = vunpack.c.l.b16 %v336
        %v465 = vunpack.c.l.b16 %v337
        %v466 = vunpack.c.l.b16 %v338
        %v467 = vunpack.c.l.b16 %v339
        %v468 = vunpack.c.l.b16 %v340
        %v469 = vunpack.c.l.b16 %v341
        %v470 = vunpack.c.l.b16 %v342
        %v471 = vunpack.c.l.b16 %v343
        %v472 = vunpack.c.l.b16 %v344
        %v473 = vunpack.c.l.b16 %v345
        %v474 = vunpack.c.l.b16 %v346
        %v475 = vunpack.c.l.b16 %v347
        %v476 = vpack.c.b16 %v461, %v460
        %v477 = vpack.c.b16 %v463, %v462
        %v478 = vpack.c.b16 %v465, %v464
        %v479 = vpack.c.b16 %v467, %v466
        %v480 = vpack.c.b16 %v469, %v468
        %v481 = vpack.c.b16 %v471, %v470
        %v482 = vpack.c.b16 %v473, %v472
        %v483 = vpack.c.b16 %v475, %v474
        %492 = vmatprep.subr.bf16.mxu0 0
        %493 = vmatpush1.bf16.msra.mxu0 %v476
        %494 = vmatprep.subr.bf16.mxu0 0
        %495 = vmatpush1.bf16.msra.mxu0 %v477
        %496 = vmatprep.subr.bf16.mxu0 0
        %497 = vmatpush1.bf16.msra.mxu0 %v478
        %498 = vmatprep.subr.bf16.mxu0 0
        %499 = vmatpush1.bf16.msra.mxu0 %v479
        %500 = vmatprep.subr.bf16.mxu0 0
        %501 = vmatpush1.bf16.msra.mxu0 %v480
        %502 = vmatprep.subr.bf16.mxu0 0
        %503 = vmatpush1.bf16.msra.mxu0 %v481
        %504 = vmatprep.subr.bf16.mxu0 0
        %505 = vmatpush1.bf16.msra.mxu0 %v482
        %506 = vmatprep.subr.bf16.mxu0 0
        %507 = vmatpush1.bf16.msra.mxu0 %v483
        %508 = vmatprep.subr.bf16.mxu0 0
        %509 = vmatpush1.bf16.msra.mxu0 0
        %510 = vmatprep.subr.bf16.mxu0 0
        %511 = vmatpush1.bf16.msra.mxu0 0
        %512 = vmatprep.subr.bf16.mxu0 0
        %513 = vmatpush1.bf16.msra.mxu0 0
        %514 = vmatprep.subr.bf16.mxu0 0
        %515 = vmatpush1.bf16.msra.mxu0 0
        %516 = vmatprep.subr.bf16.mxu0 0
        %517 = vmatpush1.bf16.msra.mxu0 0
        %518 = vmatprep.subr.bf16.mxu0 0
        %519 = vmatpush1.bf16.msra.mxu0 0
        %520 = vmatprep.subr.bf16.mxu0 0
        %521 = vmatpush1.bf16.msra.mxu0 0
        %522 = vmatprep.subr.bf16.mxu0 0
        %523 = vmatpush1.bf16.msra.mxu0 0
        %524 = vmatprep.mubr.bf16.mxu0 0
        %525 = vmatmul.mubr.bf16.gmra.mrb[0].mxu0 %v412
        %v526 = vpop.f32.mrb[0].mxu0
        %v527 = vadd.f32 0.0, %v526
        %v528 = vpop.f32.mrb[0].mxu0
        %v529 = vpop.f32.mrb[0].mxu0
        %v530 = vadd.f32 0.0, %v529
        %v531 = vpop.f32.mrb[0].mxu0
        %532 = vmatprep.mubr.bf16.mxu0 0
        %533 = vmatmul.mubr.bf16.gmra.mrb[0].mxu0 %v413
        %v534 = vpop.f32.mrb[0].mxu0
        %v535 = vadd.f32 0.0, %v534
        %v536 = vpop.f32.mrb[0].mxu0
        %v537 = vpop.f32.mrb[0].mxu0
        %v538 = vadd.f32 0.0, %v537
        %v539 = vpop.f32.mrb[0].mxu0
        %540 = vmatprep.mubr.bf16.mxu0 0
        %541 = vmatmul.mubr.bf16.gmra.mrb[0].mxu0 %v414
        %v542 = vpop.f32.mrb[0].mxu0
        %v543 = vadd.f32 0.0, %v542
        %v544 = vpop.f32.mrb[0].mxu0
        %v545 = vpop.f32.mrb[0].mxu0
        %v546 = vadd.f32 0.0, %v545
        %v547 = vpop.f32.mrb[0].mxu0
        %548 = vmatprep.mubr.bf16.mxu0 0
        %549 = vmatmul.mubr.bf16.gmra.mrb[0].mxu0 %v415
        %v550 = vpop.f32.mrb[0].mxu0
        %v551 = vadd.f32 0.0, %v550
        %v552 = vpop.f32.mrb[0].mxu0
        %v553 = vpop.f32.mrb[0].mxu0
        %v554 = vadd.f32 0.0, %v553
        %v555 = vpop.f32.mrb[0].mxu0
        %556 = vmatprep.mubr.bf16.mxu0 0
        %557 = vmatmul.mubr.bf16.gmra.mrb[0].mxu0 %v416
        %v558 = vpop.f32.mrb[0].mxu0
        %v559 = vadd.f32 0.0, %v558
        %v560 = vpop.f32.mrb[0].mxu0
        %v561 = vpop.f32.mrb[0].mxu0
        %v562 = vadd.f32 0.0, %v561
        %v563 = vpop.f32.mrb[0].mxu0
        %564 = vmatprep.mubr.bf16.mxu0 0
        %565 = vmatmul.mubr.bf16.gmra.mrb[0].mxu0 %v417
        %v566 = vpop.f32.mrb[0].mxu0
        %v567 = vadd.f32 0.0, %v566
        %v568 = vpop.f32.mrb[0].mxu0
        %v569 = vpop.f32.mrb[0].mxu0
        %v570 = vadd.f32 0.0, %v569
        %v571 = vpop.f32.mrb[0].mxu0
        %572 = vmatprep.mubr.bf16.mxu0 0
        %573 = vmatmul.mubr.bf16.gmra.mrb[0].mxu0 %v418
        %v574 = vpop.f32.mrb[0].mxu0
        %v575 = vadd.f32 0.0, %v574
        %v576 = vpop.f32.mrb[0].mxu0
        %v577 = vpop.f32.mrb[0].mxu0
        %v578 = vadd.f32 0.0, %v577
        %v579 = vpop.f32.mrb[0].mxu0
        %580 = vmatprep.mubr.bf16.mxu0 0
        %581 = vmatmul.mubr.bf16.gmra.mrb[0].mxu0 %v419
        %v582 = vpop.f32.mrb[0].mxu0
        %v583 = vadd.f32 0.0, %v582
        %v584 = vpop.f32.mrb[0].mxu0
        %v585 = vpop.f32.mrb[0].mxu0
        %v586 = vadd.f32 0.0, %v585
        %v587 = vpop.f32.mrb[0].mxu0
        %588 = vmatprep.mubr.bf16.mxu0 0
        %589 = vmatmul.mubr.bf16.gmra.mrb[0].mxu0 %v420
        %v590 = vpop.f32.mrb[0].mxu0
        %v591 = vadd.f32 0.0, %v590
        %v592 = vpop.f32.mrb[0].mxu0
        %v593 = vpop.f32.mrb[0].mxu0
        %v594 = vadd.f32 0.0, %v593
        %v595 = vpop.f32.mrb[0].mxu0
        %596 = vmatprep.mubr.bf16.mxu0 0
        %597 = vmatmul.mubr.bf16.gmra.mrb[0].mxu0 %v421
        %v598 = vpop.f32.mrb[0].mxu0
        %v599 = vadd.f32 0.0, %v598
        %v600 = vpop.f32.mrb[0].mxu0
        %v601 = vpop.f32.mrb[0].mxu0
        %v602 = vadd.f32 0.0, %v601
        %v603 = vpop.f32.mrb[0].mxu0
        %604 = vmatprep.mubr.bf16.mxu0 0
        %605 = vmatmul.mubr.bf16.gmra.mrb[0].mxu0 %v422
        %v606 = vpop.f32.mrb[0].mxu0
        %v607 = vadd.f32 0.0, %v606
        %v608 = vpop.f32.mrb[0].mxu0
        %v609 = vpop.f32.mrb[0].mxu0
        %v610 = vadd.f32 0.0, %v609
        %v611 = vpop.f32.mrb[0].mxu0
        %612 = vmatprep.mubr.bf16.mxu0 0
        %613 = vmatmul.mubr.bf16.gmra.mrb[0].mxu0 %v423
        %v614 = vpop.f32.mrb[0].mxu0
        %v615 = vadd.f32 0.0, %v614
        %v616 = vpop.f32.mrb[0].mxu0
        %v617 = vpop.f32.mrb[0].mxu0
        %v618 = vadd.f32 0.0, %v617
        %v619 = vpop.f32.mrb[0].mxu0
        %620 = vmatprep.mubr.bf16.mxu0 0
        %621 = vmatmul.mubr.bf16.gmra.mrb[0].mxu0 %v424
        %v622 = vpop.f32.mrb[0].mxu0
        %v623 = vadd.f32 0.0, %v622
        %v624 = vpop.f32.mrb[0].mxu0
        %v625 = vpop.f32.mrb[0].mxu0
        %v626 = vadd.f32 0.0, %v625
        %v627 = vpop.f32.mrb[0].mxu0
        %628 = vmatprep.mubr.bf16.mxu0 0
        %629 = vmatmul.mubr.bf16.gmra.mrb[0].mxu0 %v425
        %v630 = vpop.f32.mrb[0].mxu0
        %v631 = vadd.f32 0.0, %v630
        %v632 = vpop.f32.mrb[0].mxu0
        %v633 = vpop.f32.mrb[0].mxu0
        %v634 = vadd.f32 0.0, %v633
        %v635 = vpop.f32.mrb[0].mxu0
        %636 = vmatprep.mubr.bf16.mxu0 0
        %637 = vmatmul.mubr.bf16.gmra.mrb[0].mxu0 %v426
        %v638 = vpop.f32.mrb[0].mxu0
        %v639 = vadd.f32 0.0, %v638
        %v640 = vpop.f32.mrb[0].mxu0
        %v641 = vpop.f32.mrb[0].mxu0
        %v642 = vadd.f32 0.0, %v641
        %v643 = vpop.f32.mrb[0].mxu0
        %644 = vmatprep.mubr.bf16.mxu0 0
        %645 = vmatmul.mubr.bf16.gmra.mrb[0].mxu0 %v427
        %v646 = vpop.f32.mrb[0].mxu0
        %v647 = vadd.f32 0.0, %v646
        %v648 = vpop.f32.mrb[0].mxu0
        %v649 = vpop.f32.mrb[0].mxu0
        %v650 = vadd.f32 0.0, %v649
        %v651 = vpop.f32.mrb[0].mxu0
        %652 = vdwg.mxu0
        %v653 = vpack.c.bf16 %v530, %v527
        %v654 = vpack.c.bf16 %v538, %v535
        %v655 = vpack.c.bf16 %v546, %v543
        %v656 = vpack.c.bf16 %v554, %v551
        %v657 = vpack.c.bf16 %v562, %v559
        %v658 = vpack.c.bf16 %v570, %v567
        %v659 = vpack.c.bf16 %v578, %v575
        %v660 = vpack.c.bf16 %v586, %v583
        %v661 = vpack.c.bf16 %v594, %v591
        %v662 = vpack.c.bf16 %v602, %v599
        %v663 = vpack.c.bf16 %v610, %v607
        %v664 = vpack.c.bf16 %v618, %v615
        %v665 = vpack.c.bf16 %v626, %v623
        %v666 = vpack.c.bf16 %v634, %v631
        %v667 = vpack.c.bf16 %v642, %v639
        %v668 = vpack.c.bf16 %v650, %v647
        %v685 = vunpack.c.l.b16 %v653
        %v686 = vunpack.c.h.b16 %v653
        %v687 = vunpack.c.l.b16 %v654
        %v688 = vunpack.c.h.b16 %v654
        %v689 = vunpack.c.l.b16 %v655
        %v690 = vunpack.c.h.b16 %v655
        %v691 = vunpack.c.l.b16 %v656
        %v692 = vunpack.c.h.b16 %v656
        %v693 = vunpack.c.l.b16 %v657
        %v694 = vunpack.c.h.b16 %v657
        %v695 = vunpack.c.l.b16 %v658
        %v696 = vunpack.c.h.b16 %v658
        %v697 = vunpack.c.l.b16 %v659
        %v698 = vunpack.c.h.b16 %v659
        %v699 = vunpack.c.l.b16 %v660
        %v700 = vunpack.c.h.b16 %v660
        %v701 = vunpack.c.l.b16 %v661
        %v702 = vunpack.c.h.b16 %v661
        %v703 = vunpack.c.l.b16 %v662
        %v704 = vunpack.c.h.b16 %v662
        %v705 = vunpack.c.l.b16 %v663
        %v706 = vunpack.c.h.b16 %v663
        %v707 = vunpack.c.l.b16 %v664
        %v708 = vunpack.c.h.b16 %v664
        %v709 = vunpack.c.l.b16 %v665
        %v710 = vunpack.c.h.b16 %v665
        %v711 = vunpack.c.l.b16 %v666
        %v712 = vunpack.c.h.b16 %v666
        %v713 = vunpack.c.l.b16 %v667
        %v714 = vunpack.c.h.b16 %v667
        %v715 = vunpack.c.l.b16 %v668
        %v716 = vunpack.c.h.b16 %v668
        %v717 = vpack.c.b16 %v685, %v685
        %v718 = vpack.c.b16 %v686, %v686
        %v719 = vpack.c.b16 %v687, %v687
        %v720 = vpack.c.b16 %v688, %v688
        %v721 = vpack.c.b16 %v689, %v689
        %v722 = vpack.c.b16 %v690, %v690
        %v723 = vpack.c.b16 %v691, %v691
        %v724 = vpack.c.b16 %v692, %v692
        %v725 = vpack.c.b16 %v693, %v693
        %v726 = vpack.c.b16 %v694, %v694
        %v727 = vpack.c.b16 %v695, %v695
        %v728 = vpack.c.b16 %v696, %v696
        %v729 = vpack.c.b16 %v697, %v697
        %v730 = vpack.c.b16 %v698, %v698
        %v731 = vpack.c.b16 %v699, %v699
        %v732 = vpack.c.b16 %v700, %v700
        %v733 = vpack.c.b16 %v701, %v701
        %v734 = vpack.c.b16 %v702, %v702
        %v735 = vpack.c.b16 %v703, %v703
        %v736 = vpack.c.b16 %v704, %v704
        %v737 = vpack.c.b16 %v705, %v705
        %v738 = vpack.c.b16 %v706, %v706
        %v739 = vpack.c.b16 %v707, %v707
        %v740 = vpack.c.b16 %v708, %v708
        %v741 = vpack.c.b16 %v709, %v709
        %v742 = vpack.c.b16 %v710, %v710
        %v743 = vpack.c.b16 %v711, %v711
        %v744 = vpack.c.b16 %v712, %v712
        %v745 = vpack.c.b16 %v713, %v713
        %v746 = vpack.c.b16 %v714, %v714
        %v747 = vpack.c.b16 %v715, %v715
        %v748 = vpack.c.b16 %v716, %v716
        %781 = vst [vmem:[%s276] sm:$0xf] %v717
        %782 = vst [vmem:[%s276 + $0x4] sm:$0xf] %v718
        %783 = vst [vmem:[%s276 + $0x8] sm:$0xf] %v719
        %784 = vst [vmem:[%s276 + $0xc] sm:$0xf] %v720
        %785 = vst [vmem:[%s276 + $0x10] sm:$0xf] %v721
        %786 = vst [vmem:[%s276 + $0x14] sm:$0xf] %v722
        %787 = vst [vmem:[%s276 + $0x18] sm:$0xf] %v723
        %788 = vst [vmem:[%s276 + $0x1c] sm:$0xf] %v724
        %789 = vst [vmem:[%s276 + $0x80] sm:$0xf] %v725
        %790 = vst [vmem:[%s276 + $0x84] sm:$0xf] %v726
        %791 = vst [vmem:[%s276 + $0x88] sm:$0xf] %v727
        %792 = vst [vmem:[%s276 + $0x8c] sm:$0xf] %v728
        %793 = vst [vmem:[%s276 + $0x90] sm:$0xf] %v729
        %794 = vst [vmem:[%s276 + $0x94] sm:$0xf] %v730
        %795 = vst [vmem:[%s276 + $0x98] sm:$0xf] %v731
        %796 = vst [vmem:[%s276 + $0x9c] sm:$0xf] %v732
        %797 = vst [vmem:[%s276 + $0x100] sm:$0xf] %v733
        %798 = vst [vmem:[%s276 + $0x104] sm:$0xf] %v734
        %799 = vst [vmem:[%s276 + $0x108] sm:$0xf] %v735
        %800 = vst [vmem:[%s276 + $0x10c] sm:$0xf] %v736
        %801 = vst [vmem:[%s276 + $0x110] sm:$0xf] %v737
        %802 = vst [vmem:[%s276 + $0x114] sm:$0xf] %v738
        %803 = vst [vmem:[%s276 + $0x118] sm:$0xf] %v739
        %804 = vst [vmem:[%s276 + $0x11c] sm:$0xf] %v740
        %805 = vst [vmem:[%s276 + $0x180] sm:$0xf] %v741
        %806 = vst [vmem:[%s276 + $0x184] sm:$0xf] %v742
        %807 = vst [vmem:[%s276 + $0x188] sm:$0xf] %v743
        %808 = vst [vmem:[%s276 + $0x18c] sm:$0xf] %v744
        %809 = vst [vmem:[%s276 + $0x190] sm:$0xf] %v745
        %810 = vst [vmem:[%s276 + $0x194] sm:$0xf] %v746
        %811 = vst [vmem:[%s276 + $0x198] sm:$0xf] %v747
        %812 = vst [vmem:[%s276 + $0x19c] sm:$0xf] %v748
        %v813 = vld [vmem:[%s282] sm:$0x1]
        %v814 = vadd.f32 %v527, %v530
        %v815 = vadd.f32 %v814, %v535
        %v816 = vadd.f32 %v815, %v538
        %v817 = vadd.f32 %v816, %v543
        %v818 = vadd.f32 %v817, %v546
        %v819 = vadd.f32 %v818, %v551
        %v820 = vadd.f32 %v819, %v554
        %v821 = vadd.f32 %v820, %v559
        %v822 = vadd.f32 %v821, %v562
        %v823 = vadd.f32 %v822, %v567
        %v824 = vadd.f32 %v823, %v570
        %v825 = vadd.f32 %v824, %v575
        %v826 = vadd.f32 %v825, %v578
        %v827 = vadd.f32 %v826, %v583
        %v828 = vadd.f32 %v827, %v586
        %v829 = vadd.f32 %v828, %v591
        %v830 = vadd.f32 %v829, %v594
        %v831 = vadd.f32 %v830, %v599
        %v832 = vadd.f32 %v831, %v602
        %v833 = vadd.f32 %v832, %v607
        %v834 = vadd.f32 %v833, %v610
        %v835 = vadd.f32 %v834, %v615
        %v836 = vadd.f32 %v835, %v618
        %v837 = vadd.f32 %v836, %v623
        %v838 = vadd.f32 %v837, %v626
        %v839 = vadd.f32 %v838, %v631
        %v840 = vadd.f32 %v839, %v634
        %v841 = vadd.f32 %v840, %v639
        %v842 = vadd.f32 %v841, %v642
        %v843 = vadd.f32 %v842, %v647
        %v844 = vadd.f32 %v843, %v650
        %v845 = vrot.slane %v844, 4
        %v846 = vadd.f32 %v844, %v845
        %v847 = vrot.slane %v846, 2
        %v848 = vadd.f32 %v846, %v847
        %v849 = vrot.slane %v848, 1
        %v850 = vadd.f32 %v848, %v849
        %v851 = vadd.f32 %v813, %v850
        %852 = vst [vmem:[%s282] sm:$0x1] %v851
        %v853 = vld [vmem:[%s288] sm:$0x1]
        %v854 = vmul.f32 %v527, %v527
        %v855 = vmul.f32 %v530, %v530
        %v856 = vmul.f32 %v535, %v535
        %v857 = vmul.f32 %v538, %v538
        %v858 = vmul.f32 %v543, %v543
        %v859 = vmul.f32 %v546, %v546
        %v860 = vmul.f32 %v551, %v551
        %v861 = vmul.f32 %v554, %v554
        %v862 = vmul.f32 %v559, %v559
        %v863 = vmul.f32 %v562, %v562
        %v864 = vmul.f32 %v567, %v567
        %v865 = vmul.f32 %v570, %v570
        %v866 = vmul.f32 %v575, %v575
        %v867 = vmul.f32 %v578, %v578
        %v868 = vmul.f32 %v583, %v583
        %v869 = vmul.f32 %v586, %v586
        %v870 = vmul.f32 %v591, %v591
        %v871 = vmul.f32 %v594, %v594
        %v872 = vmul.f32 %v599, %v599
        %v873 = vmul.f32 %v602, %v602
        %v874 = vmul.f32 %v607, %v607
        %v875 = vmul.f32 %v610, %v610
        %v876 = vmul.f32 %v615, %v615
        %v877 = vmul.f32 %v618, %v618
        %v878 = vmul.f32 %v623, %v623
        %v879 = vmul.f32 %v626, %v626
        %v880 = vmul.f32 %v631, %v631
        %v881 = vmul.f32 %v634, %v634
        %v882 = vmul.f32 %v639, %v639
        %v883 = vmul.f32 %v642, %v642
        %v884 = vmul.f32 %v647, %v647
        %v885 = vmul.f32 %v650, %v650
        %v886 = vadd.f32 %v854, %v855
        %v887 = vadd.f32 %v886, %v856
        %v888 = vadd.f32 %v887, %v857
        %v889 = vadd.f32 %v888, %v858
        %v890 = vadd.f32 %v889, %v859
        %v891 = vadd.f32 %v890, %v860
        %v892 = vadd.f32 %v891, %v861
        %v893 = vadd.f32 %v892, %v862
        %v894 = vadd.f32 %v893, %v863
        %v895 = vadd.f32 %v894, %v864
        %v896 = vadd.f32 %v895, %v865
        %v897 = vadd.f32 %v896, %v866
        %v898 = vadd.f32 %v897, %v867
        %v899 = vadd.f32 %v898, %v868
        %v900 = vadd.f32 %v899, %v869
        %v901 = vadd.f32 %v900, %v870
        %v902 = vadd.f32 %v901, %v871
        %v903 = vadd.f32 %v902, %v872
        %v904 = vadd.f32 %v903, %v873
        %v905 = vadd.f32 %v904, %v874
        %v906 = vadd.f32 %v905, %v875
        %v907 = vadd.f32 %v906, %v876
        %v908 = vadd.f32 %v907, %v877
        %v909 = vadd.f32 %v908, %v878
        %v910 = vadd.f32 %v909, %v879
        %v911 = vadd.f32 %v910, %v880
        %v912 = vadd.f32 %v911, %v881
        %v913 = vadd.f32 %v912, %v882
        %v914 = vadd.f32 %v913, %v883
        %v915 = vadd.f32 %v914, %v884
        %v916 = vadd.f32 %v915, %v885
        %v917 = vrot.slane %v916, 4
        %v918 = vadd.f32 %v916, %v917
        %v919 = vrot.slane %v918, 2
        %v920 = vadd.f32 %v918, %v919
        %v921 = vrot.slane %v920, 1
        %v922 = vadd.f32 %v920, %v921
        %v923 = vadd.f32 %v853, %v922
        %924 = vst [vmem:[%s288] sm:$0x1] %v923
        %s925 = scalar_lea.vmem %s252, 32 [#allocation2]
        %v926 = vld [vmem:[%s925] sm:$0xf]
        %v927 = vld [vmem:[%s925 + $0x4] sm:$0xf]
        %v928 = vld [vmem:[%s925 + $0x8] sm:$0xf]
        %v929 = vld [vmem:[%s925 + $0xc] sm:$0xf]
        %v930 = vld [vmem:[%s925 + $0x10] sm:$0xf]
        %v931 = vld [vmem:[%s925 + $0x14] sm:$0xf]
        %v932 = vld [vmem:[%s925 + $0x18] sm:$0xf]
        %v933 = vld [vmem:[%s925 + $0x1c] sm:$0xf]
        %v934 = vld [vmem:[%s925 + $0x80] sm:$0xf]
        %v935 = vld [vmem:[%s925 + $0x84] sm:$0xf]
        %v936 = vld [vmem:[%s925 + $0x88] sm:$0xf]
        %v937 = vld [vmem:[%s925 + $0x8c] sm:$0xf]
        %v938 = vld [vmem:[%s925 + $0x90] sm:$0xf]
        %v939 = vld [vmem:[%s925 + $0x94] sm:$0xf]
        %v940 = vld [vmem:[%s925 + $0x98] sm:$0xf]
        %v941 = vld [vmem:[%s925 + $0x9c] sm:$0xf]
        %v942 = vld [vmem:[%s925 + $0x100] sm:$0xf]
        %v943 = vld [vmem:[%s925 + $0x104] sm:$0xf]
        %v944 = vld [vmem:[%s925 + $0x108] sm:$0xf]
        %v945 = vld [vmem:[%s925 + $0x10c] sm:$0xf]
        %v946 = vld [vmem:[%s925 + $0x110] sm:$0xf]
        %v947 = vld [vmem:[%s925 + $0x114] sm:$0xf]
        %v948 = vld [vmem:[%s925 + $0x118] sm:$0xf]
        %v949 = vld [vmem:[%s925 + $0x11c] sm:$0xf]
        %v950 = vld [vmem:[%s925 + $0x180] sm:$0xf]
        %v951 = vld [vmem:[%s925 + $0x184] sm:$0xf]
        %v952 = vld [vmem:[%s925 + $0x188] sm:$0xf]
        %v953 = vld [vmem:[%s925 + $0x18c] sm:$0xf]
        %v954 = vld [vmem:[%s925 + $0x190] sm:$0xf]
        %v955 = vld [vmem:[%s925 + $0x194] sm:$0xf]
        %v956 = vld [vmem:[%s925 + $0x198] sm:$0xf]
        %v957 = vld [vmem:[%s925 + $0x19c] sm:$0xf]
        %v958 = vld [vmem:[#allocation5] sm:$0xf]
        %v959 = vld [vmem:[#allocation5 + $0x4] sm:$0xf]
        %v960 = vld [vmem:[#allocation5 + $0x8] sm:$0xf]
        %v961 = vld [vmem:[#allocation5 + $0xc] sm:$0xf]
        %v962 = vld [vmem:[#allocation5 + $0x10] sm:$0xf]
        %v963 = vld [vmem:[#allocation5 + $0x14] sm:$0xf]
        %v964 = vld [vmem:[#allocation5 + $0x18] sm:$0xf]
        %v965 = vld [vmem:[#allocation5 + $0x1c] sm:$0xf]
        %v966 = vld [vmem:[#allocation5 + $0x20] sm:$0xf]
        %v967 = vld [vmem:[#allocation5 + $0x24] sm:$0xf]
        %v968 = vld [vmem:[#allocation5 + $0x28] sm:$0xf]
        %v969 = vld [vmem:[#allocation5 + $0x2c] sm:$0xf]
        %v970 = vld [vmem:[#allocation5 + $0x30] sm:$0xf]
        %v971 = vld [vmem:[#allocation5 + $0x34] sm:$0xf]
        %v972 = vld [vmem:[#allocation5 + $0x38] sm:$0xf]
        %v973 = vld [vmem:[#allocation5 + $0x3c] sm:$0xf]
        %v1006 = vunpack.c.l.b16 %v926
        %v1007 = vunpack.c.l.b16 %v927
        %v1008 = vunpack.c.l.b16 %v928
        %v1009 = vunpack.c.l.b16 %v929
        %v1010 = vunpack.c.l.b16 %v930
        %v1011 = vunpack.c.l.b16 %v931
        %v1012 = vunpack.c.l.b16 %v932
        %v1013 = vunpack.c.l.b16 %v933
        %v1014 = vunpack.c.l.b16 %v934
        %v1015 = vunpack.c.l.b16 %v935
        %v1016 = vunpack.c.l.b16 %v936
        %v1017 = vunpack.c.l.b16 %v937
        %v1018 = vunpack.c.l.b16 %v938
        %v1019 = vunpack.c.l.b16 %v939
        %v1020 = vunpack.c.l.b16 %v940
        %v1021 = vunpack.c.l.b16 %v941
        %v1022 = vunpack.c.l.b16 %v942
        %v1023 = vunpack.c.l.b16 %v943
        %v1024 = vunpack.c.l.b16 %v944
        %v1025 = vunpack.c.l.b16 %v945
        %v1026 = vunpack.c.l.b16 %v946
        %v1027 = vunpack.c.l.b16 %v947
        %v1028 = vunpack.c.l.b16 %v948
        %v1029 = vunpack.c.l.b16 %v949
        %v1030 = vunpack.c.l.b16 %v950
        %v1031 = vunpack.c.l.b16 %v951
        %v1032 = vunpack.c.l.b16 %v952
        %v1033 = vunpack.c.l.b16 %v953
        %v1034 = vunpack.c.l.b16 %v954
        %v1035 = vunpack.c.l.b16 %v955
        %v1036 = vunpack.c.l.b16 %v956
        %v1037 = vunpack.c.l.b16 %v957
        %v1038 = vpack.c.b16 %v1007, %v1006
        %v1039 = vpack.c.b16 %v1009, %v1008
        %v1040 = vpack.c.b16 %v1011, %v1010
        %v1041 = vpack.c.b16 %v1013, %v1012
        %v1042 = vpack.c.b16 %v1015, %v1014
        %v1043 = vpack.c.b16 %v1017, %v1016
        %v1044 = vpack.c.b16 %v1019, %v1018
        %v1045 = vpack.c.b16 %v1021, %v1020
        %v1046 = vpack.c.b16 %v1023, %v1022
        %v1047 = vpack.c.b16 %v1025, %v1024
        %v1048 = vpack.c.b16 %v1027, %v1026
        %v1049 = vpack.c.b16 %v1029, %v1028
        %v1050 = vpack.c.b16 %v1031, %v1030
        %v1051 = vpack.c.b16 %v1033, %v1032
        %v1052 = vpack.c.b16 %v1035, %v1034
        %v1053 = vpack.c.b16 %v1037, %v1036
        %v1086 = vunpack.c.l.b16 %v958
        %v1087 = vunpack.c.l.b16 %v959
        %v1088 = vunpack.c.l.b16 %v960
        %v1089 = vunpack.c.l.b16 %v961
        %v1090 = vunpack.c.l.b16 %v962
        %v1091 = vunpack.c.l.b16 %v963
        %v1092 = vunpack.c.l.b16 %v964
        %v1093 = vunpack.c.l.b16 %v965
        %v1094 = vunpack.c.l.b16 %v966
        %v1095 = vunpack.c.l.b16 %v967
        %v1096 = vunpack.c.l.b16 %v968
        %v1097 = vunpack.c.l.b16 %v969
        %v1098 = vunpack.c.l.b16 %v970
        %v1099 = vunpack.c.l.b16 %v971
        %v1100 = vunpack.c.l.b16 %v972
        %v1101 = vunpack.c.l.b16 %v973
        %v1102 = vpack.c.b16 %v1087, %v1086
        %v1103 = vpack.c.b16 %v1089, %v1088
        %v1104 = vpack.c.b16 %v1091, %v1090
        %v1105 = vpack.c.b16 %v1093, %v1092
        %v1106 = vpack.c.b16 %v1095, %v1094
        %v1107 = vpack.c.b16 %v1097, %v1096
        %v1108 = vpack.c.b16 %v1099, %v1098
        %v1109 = vpack.c.b16 %v1101, %v1100
        %1118 = vmatprep.subr.bf16.mxu0 0
        %1119 = vmatpush1.bf16.msra.mxu0 %v1102
        %1120 = vmatprep.subr.bf16.mxu0 0
        %1121 = vmatpush1.bf16.msra.mxu0 %v1103
        %1122 = vmatprep.subr.bf16.mxu0 0
        %1123 = vmatpush1.bf16.msra.mxu0 %v1104
        %1124 = vmatprep.subr.bf16.mxu0 0
        %1125 = vmatpush1.bf16.msra.mxu0 %v1105
        %1126 = vmatprep.subr.bf16.mxu0 0
        %1127 = vmatpush1.bf16.msra.mxu0 %v1106
        %1128 = vmatprep.subr.bf16.mxu0 0
        %1129 = vmatpush1.bf16.msra.mxu0 %v1107
        %1130 = vmatprep.subr.bf16.mxu0 0
        %1131 = vmatpush1.bf16.msra.mxu0 %v1108
        %1132 = vmatprep.subr.bf16.mxu0 0
        %1133 = vmatpush1.bf16.msra.mxu0 %v1109
        %1134 = vmatprep.subr.bf16.mxu0 0
        %1135 = vmatpush1.bf16.msra.mxu0 0
        %1136 = vmatprep.subr.bf16.mxu0 0
        %1137 = vmatpush1.bf16.msra.mxu0 0
        %1138 = vmatprep.subr.bf16.mxu0 0
        %1139 = vmatpush1.bf16.msra.mxu0 0
        %1140 = vmatprep.subr.bf16.mxu0 0
        %1141 = vmatpush1.bf16.msra.mxu0 0
        %1142 = vmatprep.subr.bf16.mxu0 0
        %1143 = vmatpush1.bf16.msra.mxu0 0
        %1144 = vmatprep.subr.bf16.mxu0 0
        %1145 = vmatpush1.bf16.msra.mxu0 0
        %1146 = vmatprep.subr.bf16.mxu0 0
        %1147 = vmatpush1.bf16.msra.mxu0 0
        %1148 = vmatprep.subr.bf16.mxu0 0
        %1149 = vmatpush1.bf16.msra.mxu0 0
        %1150 = vmatprep.mubr.bf16.mxu0 0
        %1151 = vmatmul.mubr.bf16.gmra.mrb[0].mxu0 %v1038
        %v1152 = vpop.f32.mrb[0].mxu0
        %v1153 = vadd.f32 0.0, %v1152
        %v1154 = vpop.f32.mrb[0].mxu0
        %v1155 = vpop.f32.mrb[0].mxu0
        %v1156 = vadd.f32 0.0, %v1155
        %v1157 = vpop.f32.mrb[0].mxu0
        %1158 = vmatprep.mubr.bf16.mxu0 0
        %1159 = vmatmul.mubr.bf16.gmra.mrb[0].mxu0 %v1039
        %v1160 = vpop.f32.mrb[0].mxu0
        %v1161 = vadd.f32 0.0, %v1160
        %v1162 = vpop.f32.mrb[0].mxu0
        %v1163 = vpop.f32.mrb[0].mxu0
        %v1164 = vadd.f32 0.0, %v1163
        %v1165 = vpop.f32.mrb[0].mxu0
        %1166 = vmatprep.mubr.bf16.mxu0 0
        %1167 = vmatmul.mubr.bf16.gmra.mrb[0].mxu0 %v1040
        %v1168 = vpop.f32.mrb[0].mxu0
        %v1169 = vadd.f32 0.0, %v1168
        %v1170 = vpop.f32.mrb[0].mxu0
        %v1171 = vpop.f32.mrb[0].mxu0
        %v1172 = vadd.f32 0.0, %v1171
        %v1173 = vpop.f32.mrb[0].mxu0
        %1174 = vmatprep.mubr.bf16.mxu0 0
        %1175 = vmatmul.mubr.bf16.gmra.mrb[0].mxu0 %v1041
        %v1176 = vpop.f32.mrb[0].mxu0
        %v1177 = vadd.f32 0.0, %v1176
        %v1178 = vpop.f32.mrb[0].mxu0
        %v1179 = vpop.f32.mrb[0].mxu0
        %v1180 = vadd.f32 0.0, %v1179
        %v1181 = vpop.f32.mrb[0].mxu0
        %1182 = vmatprep.mubr.bf16.mxu0 0
        %1183 = vmatmul.mubr.bf16.gmra.mrb[0].mxu0 %v1042
        %v1184 = vpop.f32.mrb[0].mxu0
        %v1185 = vadd.f32 0.0, %v1184
        %v1186 = vpop.f32.mrb[0].mxu0
        %v1187 = vpop.f32.mrb[0].mxu0
        %v1188 = vadd.f32 0.0, %v1187
        %v1189 = vpop.f32.mrb[0].mxu0
        %1190 = vmatprep.mubr.bf16.mxu0 0
        %1191 = vmatmul.mubr.bf16.gmra.mrb[0].mxu0 %v1043
        %v1192 = vpop.f32.mrb[0].mxu0
        %v1193 = vadd.f32 0.0, %v1192
        %v1194 = vpop.f32.mrb[0].mxu0
        %v1195 = vpop.f32.mrb[0].mxu0
        %v1196 = vadd.f32 0.0, %v1195
        %v1197 = vpop.f32.mrb[0].mxu0
        %1198 = vmatprep.mubr.bf16.mxu0 0
        %1199 = vmatmul.mubr.bf16.gmra.mrb[0].mxu0 %v1044
        %v1200 = vpop.f32.mrb[0].mxu0
        %v1201 = vadd.f32 0.0, %v1200
        %v1202 = vpop.f32.mrb[0].mxu0
        %v1203 = vpop.f32.mrb[0].mxu0
        %v1204 = vadd.f32 0.0, %v1203
        %v1205 = vpop.f32.mrb[0].mxu0
        %1206 = vmatprep.mubr.bf16.mxu0 0
        %1207 = vmatmul.mubr.bf16.gmra.mrb[0].mxu0 %v1045
        %v1208 = vpop.f32.mrb[0].mxu0
        %v1209 = vadd.f32 0.0, %v1208
        %v1210 = vpop.f32.mrb[0].mxu0
        %v1211 = vpop.f32.mrb[0].mxu0
        %v1212 = vadd.f32 0.0, %v1211
        %v1213 = vpop.f32.mrb[0].mxu0
        %1214 = vmatprep.mubr.bf16.mxu0 0
        %1215 = vmatmul.mubr.bf16.gmra.mrb[0].mxu0 %v1046
        %v1216 = vpop.f32.mrb[0].mxu0
        %v1217 = vadd.f32 0.0, %v1216
        %v1218 = vpop.f32.mrb[0].mxu0
        %v1219 = vpop.f32.mrb[0].mxu0
        %v1220 = vadd.f32 0.0, %v1219
        %v1221 = vpop.f32.mrb[0].mxu0
        %1222 = vmatprep.mubr.bf16.mxu0 0
        %1223 = vmatmul.mubr.bf16.gmra.mrb[0].mxu0 %v1047
        %v1224 = vpop.f32.mrb[0].mxu0
        %v1225 = vadd.f32 0.0, %v1224
        %v1226 = vpop.f32.mrb[0].mxu0
        %v1227 = vpop.f32.mrb[0].mxu0
        %v1228 = vadd.f32 0.0, %v1227
        %v1229 = vpop.f32.mrb[0].mxu0
        %1230 = vmatprep.mubr.bf16.mxu0 0
        %1231 = vmatmul.mubr.bf16.gmra.mrb[0].mxu0 %v1048
        %v1232 = vpop.f32.mrb[0].mxu0
        %v1233 = vadd.f32 0.0, %v1232
        %v1234 = vpop.f32.mrb[0].mxu0
        %v1235 = vpop.f32.mrb[0].mxu0
        %v1236 = vadd.f32 0.0, %v1235
        %v1237 = vpop.f32.mrb[0].mxu0
        %1238 = vmatprep.mubr.bf16.mxu0 0
        %1239 = vmatmul.mubr.bf16.gmra.mrb[0].mxu0 %v1049
        %v1240 = vpop.f32.mrb[0].mxu0
        %v1241 = vadd.f32 0.0, %v1240
        %v1242 = vpop.f32.mrb[0].mxu0
        %v1243 = vpop.f32.mrb[0].mxu0
        %v1244 = vadd.f32 0.0, %v1243
        %v1245 = vpop.f32.mrb[0].mxu0
        %1246 = vmatprep.mubr.bf16.mxu0 0
        %1247 = vmatmul.mubr.bf16.gmra.mrb[0].mxu0 %v1050
        %v1248 = vpop.f32.mrb[0].mxu0
        %v1249 = vadd.f32 0.0, %v1248
        %v1250 = vpop.f32.mrb[0].mxu0
        %v1251 = vpop.f32.mrb[0].mxu0
        %v1252 = vadd.f32 0.0, %v1251
        %v1253 = vpop.f32.mrb[0].mxu0
        %1254 = vmatprep.mubr.bf16.mxu0 0
        %1255 = vmatmul.mubr.bf16.gmra.mrb[0].mxu0 %v1051
        %v1256 = vpop.f32.mrb[0].mxu0
        %v1257 = vadd.f32 0.0, %v1256
        %v1258 = vpop.f32.mrb[0].mxu0
        %v1259 = vpop.f32.mrb[0].mxu0
        %v1260 = vadd.f32 0.0, %v1259
        %v1261 = vpop.f32.mrb[0].mxu0
        %1262 = vmatprep.mubr.bf16.mxu0 0
        %1263 = vmatmul.mubr.bf16.gmra.mrb[0].mxu0 %v1052
        %v1264 = vpop.f32.mrb[0].mxu0
        %v1265 = vadd.f32 0.0, %v1264
        %v1266 = vpop.f32.mrb[0].mxu0
        %v1267 = vpop.f32.mrb[0].mxu0
        %v1268 = vadd.f32 0.0, %v1267
        %v1269 = vpop.f32.mrb[0].mxu0
        %1270 = vmatprep.mubr.bf16.mxu0 0
        %1271 = vmatmul.mubr.bf16.gmra.mrb[0].mxu0 %v1053
        %v1272 = vpop.f32.mrb[0].mxu0
        %v1273 = vadd.f32 0.0, %v1272
        %v1274 = vpop.f32.mrb[0].mxu0
        %v1275 = vpop.f32.mrb[0].mxu0
        %v1276 = vadd.f32 0.0, %v1275
        %v1277 = vpop.f32.mrb[0].mxu0
        %1278 = vdwg.mxu0
        %v1279 = vpack.c.bf16 %v1156, %v1153
        %v1280 = vpack.c.bf16 %v1164, %v1161
        %v1281 = vpack.c.bf16 %v1172, %v1169
        %v1282 = vpack.c.bf16 %v1180, %v1177
        %v1283 = vpack.c.bf16 %v1188, %v1185
        %v1284 = vpack.c.bf16 %v1196, %v1193
        %v1285 = vpack.c.bf16 %v1204, %v1201
        %v1286 = vpack.c.bf16 %v1212, %v1209
        %v1287 = vpack.c.bf16 %v1220, %v1217
        %v1288 = vpack.c.bf16 %v1228, %v1225
        %v1289 = vpack.c.bf16 %v1236, %v1233
        %v1290 = vpack.c.bf16 %v1244, %v1241
        %v1291 = vpack.c.bf16 %v1252, %v1249
        %v1292 = vpack.c.bf16 %v1260, %v1257
        %v1293 = vpack.c.bf16 %v1268, %v1265
        %v1294 = vpack.c.bf16 %v1276, %v1273
        %v1311 = vunpack.c.l.b16 %v1279
        %v1312 = vunpack.c.h.b16 %v1279
        %v1313 = vunpack.c.l.b16 %v1280
        %v1314 = vunpack.c.h.b16 %v1280
        %v1315 = vunpack.c.l.b16 %v1281
        %v1316 = vunpack.c.h.b16 %v1281
        %v1317 = vunpack.c.l.b16 %v1282
        %v1318 = vunpack.c.h.b16 %v1282
        %v1319 = vunpack.c.l.b16 %v1283
        %v1320 = vunpack.c.h.b16 %v1283
        %v1321 = vunpack.c.l.b16 %v1284
        %v1322 = vunpack.c.h.b16 %v1284
        %v1323 = vunpack.c.l.b16 %v1285
        %v1324 = vunpack.c.h.b16 %v1285
        %v1325 = vunpack.c.l.b16 %v1286
        %v1326 = vunpack.c.h.b16 %v1286
        %v1327 = vunpack.c.l.b16 %v1287
        %v1328 = vunpack.c.h.b16 %v1287
        %v1329 = vunpack.c.l.b16 %v1288
        %v1330 = vunpack.c.h.b16 %v1288
        %v1331 = vunpack.c.l.b16 %v1289
        %v1332 = vunpack.c.h.b16 %v1289
        %v1333 = vunpack.c.l.b16 %v1290
        %v1334 = vunpack.c.h.b16 %v1290
        %v1335 = vunpack.c.l.b16 %v1291
        %v1336 = vunpack.c.h.b16 %v1291
        %v1337 = vunpack.c.l.b16 %v1292
        %v1338 = vunpack.c.h.b16 %v1292
        %v1339 = vunpack.c.l.b16 %v1293
        %v1340 = vunpack.c.h.b16 %v1293
        %v1341 = vunpack.c.l.b16 %v1294
        %v1342 = vunpack.c.h.b16 %v1294
        %v1343 = vpack.c.b16 %v1311, %v1311
        %v1344 = vpack.c.b16 %v1312, %v1312
        %v1345 = vpack.c.b16 %v1313, %v1313
        %v1346 = vpack.c.b16 %v1314, %v1314
        %v1347 = vpack.c.b16 %v1315, %v1315
        %v1348 = vpack.c.b16 %v1316, %v1316
        %v1349 = vpack.c.b16 %v1317, %v1317
        %v1350 = vpack.c.b16 %v1318, %v1318
        %v1351 = vpack.c.b16 %v1319, %v1319
        %v1352 = vpack.c.b16 %v1320, %v1320
        %v1353 = vpack.c.b16 %v1321, %v1321
        %v1354 = vpack.c.b16 %v1322, %v1322
        %v1355 = vpack.c.b16 %v1323, %v1323
        %v1356 = vpack.c.b16 %v1324, %v1324
        %v1357 = vpack.c.b16 %v1325, %v1325
        %v1358 = vpack.c.b16 %v1326, %v1326
        %v1359 = vpack.c.b16 %v1327, %v1327
        %v1360 = vpack.c.b16 %v1328, %v1328
        %v1361 = vpack.c.b16 %v1329, %v1329
        %v1362 = vpack.c.b16 %v1330, %v1330
        %v1363 = vpack.c.b16 %v1331, %v1331
        %v1364 = vpack.c.b16 %v1332, %v1332
        %v1365 = vpack.c.b16 %v1333, %v1333
        %v1366 = vpack.c.b16 %v1334, %v1334
        %v1367 = vpack.c.b16 %v1335, %v1335
        %v1368 = vpack.c.b16 %v1336, %v1336
        %v1369 = vpack.c.b16 %v1337, %v1337
        %v1370 = vpack.c.b16 %v1338, %v1338
        %v1371 = vpack.c.b16 %v1339, %v1339
        %v1372 = vpack.c.b16 %v1340, %v1340
        %v1373 = vpack.c.b16 %v1341, %v1341
        %v1374 = vpack.c.b16 %v1342, %v1342
        %s1407 = scalar_lea.vmem %s276, 32 [#allocation7]
        %1408 = vst [vmem:[%s1407] sm:$0xf] %v1343
        %1409 = vst [vmem:[%s1407 + $0x4] sm:$0xf] %v1344
        %1410 = vst [vmem:[%s1407 + $0x8] sm:$0xf] %v1345
        %1411 = vst [vmem:[%s1407 + $0xc] sm:$0xf] %v1346
        %1412 = vst [vmem:[%s1407 + $0x10] sm:$0xf] %v1347
        %1413 = vst [vmem:[%s1407 + $0x14] sm:$0xf] %v1348
        %1414 = vst [vmem:[%s1407 + $0x18] sm:$0xf] %v1349
        %1415 = vst [vmem:[%s1407 + $0x1c] sm:$0xf] %v1350
        %1416 = vst [vmem:[%s1407 + $0x80] sm:$0xf] %v1351
        %1417 = vst [vmem:[%s1407 + $0x84] sm:$0xf] %v1352
        %1418 = vst [vmem:[%s1407 + $0x88] sm:$0xf] %v1353
        %1419 = vst [vmem:[%s1407 + $0x8c] sm:$0xf] %v1354
        %1420 = vst [vmem:[%s1407 + $0x90] sm:$0xf] %v1355
        %1421 = vst [vmem:[%s1407 + $0x94] sm:$0xf] %v1356
        %1422 = vst [vmem:[%s1407 + $0x98] sm:$0xf] %v1357
        %1423 = vst [vmem:[%s1407 + $0x9c] sm:$0xf] %v1358
        %1424 = vst [vmem:[%s1407 + $0x100] sm:$0xf] %v1359
        %1425 = vst [vmem:[%s1407 + $0x104] sm:$0xf] %v1360
        %1426 = vst [vmem:[%s1407 + $0x108] sm:$0xf] %v1361
        %1427 = vst [vmem:[%s1407 + $0x10c] sm:$0xf] %v1362
        %1428 = vst [vmem:[%s1407 + $0x110] sm:$0xf] %v1363
        %1429 = vst [vmem:[%s1407 + $0x114] sm:$0xf] %v1364
        %1430 = vst [vmem:[%s1407 + $0x118] sm:$0xf] %v1365
        %1431 = vst [vmem:[%s1407 + $0x11c] sm:$0xf] %v1366
        %1432 = vst [vmem:[%s1407 + $0x180] sm:$0xf] %v1367
        %1433 = vst [vmem:[%s1407 + $0x184] sm:$0xf] %v1368
        %1434 = vst [vmem:[%s1407 + $0x188] sm:$0xf] %v1369
        %1435 = vst [vmem:[%s1407 + $0x18c] sm:$0xf] %v1370
        %1436 = vst [vmem:[%s1407 + $0x190] sm:$0xf] %v1371
        %1437 = vst [vmem:[%s1407 + $0x194] sm:$0xf] %v1372
        %1438 = vst [vmem:[%s1407 + $0x198] sm:$0xf] %v1373
        %1439 = vst [vmem:[%s1407 + $0x19c] sm:$0xf] %v1374
        %v1440 = vld [vmem:[%s282] sm:$0x1]
        %v1441 = vadd.f32 %v1153, %v1156
        %v1442 = vadd.f32 %v1441, %v1161
        %v1443 = vadd.f32 %v1442, %v1164
        %v1444 = vadd.f32 %v1443, %v1169
        %v1445 = vadd.f32 %v1444, %v1172
        %v1446 = vadd.f32 %v1445, %v1177
        %v1447 = vadd.f32 %v1446, %v1180
        %v1448 = vadd.f32 %v1447, %v1185
        %v1449 = vadd.f32 %v1448, %v1188
        %v1450 = vadd.f32 %v1449, %v1193
        %v1451 = vadd.f32 %v1450, %v1196
        %v1452 = vadd.f32 %v1451, %v1201
        %v1453 = vadd.f32 %v1452, %v1204
        %v1454 = vadd.f32 %v1453, %v1209
        %v1455 = vadd.f32 %v1454, %v1212
        %v1456 = vadd.f32 %v1455, %v1217
        %v1457 = vadd.f32 %v1456, %v1220
        %v1458 = vadd.f32 %v1457, %v1225
        %v1459 = vadd.f32 %v1458, %v1228
        %v1460 = vadd.f32 %v1459, %v1233
        %v1461 = vadd.f32 %v1460, %v1236
        %v1462 = vadd.f32 %v1461, %v1241
        %v1463 = vadd.f32 %v1462, %v1244
        %v1464 = vadd.f32 %v1463, %v1249
        %v1465 = vadd.f32 %v1464, %v1252
        %v1466 = vadd.f32 %v1465, %v1257
        %v1467 = vadd.f32 %v1466, %v1260
        %v1468 = vadd.f32 %v1467, %v1265
        %v1469 = vadd.f32 %v1468, %v1268
        %v1470 = vadd.f32 %v1469, %v1273
        %v1471 = vadd.f32 %v1470, %v1276
        %v1472 = vrot.slane %v1471, 4
        %v1473 = vadd.f32 %v1471, %v1472
        %v1474 = vrot.slane %v1473, 2
        %v1475 = vadd.f32 %v1473, %v1474
        %v1476 = vrot.slane %v1475, 1
        %v1477 = vadd.f32 %v1475, %v1476
        %v1478 = vadd.f32 %v1440, %v1477
        %1479 = vst [vmem:[%s282] sm:$0x1] %v1478
        %v1480 = vld [vmem:[%s288] sm:$0x1]
        %v1481 = vmul.f32 %v1153, %v1153
        %v1482 = vmul.f32 %v1156, %v1156
        %v1483 = vmul.f32 %v1161, %v1161
        %v1484 = vmul.f32 %v1164, %v1164
        %v1485 = vmul.f32 %v1169, %v1169
        %v1486 = vmul.f32 %v1172, %v1172
        %v1487 = vmul.f32 %v1177, %v1177
        %v1488 = vmul.f32 %v1180, %v1180
        %v1489 = vmul.f32 %v1185, %v1185
        %v1490 = vmul.f32 %v1188, %v1188
        %v1491 = vmul.f32 %v1193, %v1193
        %v1492 = vmul.f32 %v1196, %v1196
        %v1493 = vmul.f32 %v1201, %v1201
        %v1494 = vmul.f32 %v1204, %v1204
        %v1495 = vmul.f32 %v1209, %v1209
        %v1496 = vmul.f32 %v1212, %v1212
        %v1497 = vmul.f32 %v1217, %v1217
        %v1498 = vmul.f32 %v1220, %v1220
        %v1499 = vmul.f32 %v1225, %v1225
        %v1500 = vmul.f32 %v1228, %v1228
        %v1501 = vmul.f32 %v1233, %v1233
        %v1502 = vmul.f32 %v1236, %v1236
        %v1503 = vmul.f32 %v1241, %v1241
        %v1504 = vmul.f32 %v1244, %v1244
        %v1505 = vmul.f32 %v1249, %v1249
        %v1506 = vmul.f32 %v1252, %v1252
        %v1507 = vmul.f32 %v1257, %v1257
        %v1508 = vmul.f32 %v1260, %v1260
        %v1509 = vmul.f32 %v1265, %v1265
        %v1510 = vmul.f32 %v1268, %v1268
        %v1511 = vmul.f32 %v1273, %v1273
        %v1512 = vmul.f32 %v1276, %v1276
        %v1513 = vadd.f32 %v1481, %v1482
        %v1514 = vadd.f32 %v1513, %v1483
        %v1515 = vadd.f32 %v1514, %v1484
        %v1516 = vadd.f32 %v1515, %v1485
        %v1517 = vadd.f32 %v1516, %v1486
        %v1518 = vadd.f32 %v1517, %v1487
        %v1519 = vadd.f32 %v1518, %v1488
        %v1520 = vadd.f32 %v1519, %v1489
        %v1521 = vadd.f32 %v1520, %v1490
        %v1522 = vadd.f32 %v1521, %v1491
        %v1523 = vadd.f32 %v1522, %v1492
        %v1524 = vadd.f32 %v1523, %v1493
        %v1525 = vadd.f32 %v1524, %v1494
        %v1526 = vadd.f32 %v1525, %v1495
        %v1527 = vadd.f32 %v1526, %v1496
        %v1528 = vadd.f32 %v1527, %v1497
        %v1529 = vadd.f32 %v1528, %v1498
        %v1530 = vadd.f32 %v1529, %v1499
        %v1531 = vadd.f32 %v1530, %v1500
        %v1532 = vadd.f32 %v1531, %v1501
        %v1533 = vadd.f32 %v1532, %v1502
        %v1534 = vadd.f32 %v1533, %v1503
        %v1535 = vadd.f32 %v1534, %v1504
        %v1536 = vadd.f32 %v1535, %v1505
        %v1537 = vadd.f32 %v1536, %v1506
        %v1538 = vadd.f32 %v1537, %v1507
        %v1539 = vadd.f32 %v1538, %v1508
        %v1540 = vadd.f32 %v1539, %v1509
        %v1541 = vadd.f32 %v1540, %v1510
        %v1542 = vadd.f32 %v1541, %v1511
        %v1543 = vadd.f32 %v1542, %v1512
        %v1544 = vrot.slane %v1543, 4
        %v1545 = vadd.f32 %v1543, %v1544
        %v1546 = vrot.slane %v1545, 2
        %v1547 = vadd.f32 %v1545, %v1546
        %v1548 = vrot.slane %v1547, 1
        %v1549 = vadd.f32 %v1547, %v1548
        %v1550 = vadd.f32 %v1480, %v1549
        %1551 = vst [vmem:[%s288] sm:$0x1] %v1550
        %s1552 = scalar_lea.vmem %s252, 64 [#allocation2]
        %v1553 = vld [vmem:[%s1552] sm:$0xf]
        %v1554 = vld [vmem:[%s1552 + $0x4] sm:$0xf]
        %v1555 = vld [vmem:[%s1552 + $0x8] sm:$0xf]
        %v1556 = vld [vmem:[%s1552 + $0xc] sm:$0xf]
        %v1557 = vld [vmem:[%s1552 + $0x10] sm:$0xf]
        %v1558 = vld [vmem:[%s1552 + $0x14] sm:$0xf]
        %v1559 = vld [vmem:[%s1552 + $0x18] sm:$0xf]
        %v1560 = vld [vmem:[%s1552 + $0x1c] sm:$0xf]
        %v1561 = vld [vmem:[%s1552 + $0x80] sm:$0xf]
        %v1562 = vld [vmem:[%s1552 + $0x84] sm:$0xf]
        %v1563 = vld [vmem:[%s1552 + $0x88] sm:$0xf]
        %v1564 = vld [vmem:[%s1552 + $0x8c] sm:$0xf]
        %v1565 = vld [vmem:[%s1552 + $0x90] sm:$0xf]
        %v1566 = vld [vmem:[%s1552 + $0x94] sm:$0xf]
        %v1567 = vld [vmem:[%s1552 + $0x98] sm:$0xf]
        %v1568 = vld [vmem:[%s1552 + $0x9c] sm:$0xf]
        %v1569 = vld [vmem:[%s1552 + $0x100] sm:$0xf]
        %v1570 = vld [vmem:[%s1552 + $0x104] sm:$0xf]
        %v1571 = vld [vmem:[%s1552 + $0x108] sm:$0xf]
        %v1572 = vld [vmem:[%s1552 + $0x10c] sm:$0xf]
        %v1573 = vld [vmem:[%s1552 + $0x110] sm:$0xf]
        %v1574 = vld [vmem:[%s1552 + $0x114] sm:$0xf]
        %v1575 = vld [vmem:[%s1552 + $0x118] sm:$0xf]
        %v1576 = vld [vmem:[%s1552 + $0x11c] sm:$0xf]
        %v1577 = vld [vmem:[%s1552 + $0x180] sm:$0xf]
        %v1578 = vld [vmem:[%s1552 + $0x184] sm:$0xf]
        %v1579 = vld [vmem:[%s1552 + $0x188] sm:$0xf]
        %v1580 = vld [vmem:[%s1552 + $0x18c] sm:$0xf]
        %v1581 = vld [vmem:[%s1552 + $0x190] sm:$0xf]
        %v1582 = vld [vmem:[%s1552 + $0x194] sm:$0xf]
        %v1583 = vld [vmem:[%s1552 + $0x198] sm:$0xf]
        %v1584 = vld [vmem:[%s1552 + $0x19c] sm:$0xf]
        %v1585 = vld [vmem:[#allocation5] sm:$0xf]
        %v1586 = vld [vmem:[#allocation5 + $0x4] sm:$0xf]
        %v1587 = vld [vmem:[#allocation5 + $0x8] sm:$0xf]
        %v1588 = vld [vmem:[#allocation5 + $0xc] sm:$0xf]
        %v1589 = vld [vmem:[#allocation5 + $0x10] sm:$0xf]
        %v1590 = vld [vmem:[#allocation5 + $0x14] sm:$0xf]
        %v1591 = vld [vmem:[#allocation5 + $0x18] sm:$0xf]
        %v1592 = vld [vmem:[#allocation5 + $0x1c] sm:$0xf]
        %v1593 = vld [vmem:[#allocation5 + $0x20] sm:$0xf]
        %v1594 = vld [vmem:[#allocation5 + $0x24] sm:$0xf]
        %v1595 = vld [vmem:[#allocation5 + $0x28] sm:$0xf]
        %v1596 = vld [vmem:[#allocation5 + $0x2c] sm:$0xf]
        %v1597 = vld [vmem:[#allocation5 + $0x30] sm:$0xf]
        %v1598 = vld [vmem:[#allocation5 + $0x34] sm:$0xf]
        %v1599 = vld [vmem:[#allocation5 + $0x38] sm:$0xf]
        %v1600 = vld [vmem:[#allocation5 + $0x3c] sm:$0xf]
        %v1633 = vunpack.c.l.b16 %v1553
        %v1634 = vunpack.c.l.b16 %v1554
        %v1635 = vunpack.c.l.b16 %v1555
        %v1636 = vunpack.c.l.b16 %v1556
        %v1637 = vunpack.c.l.b16 %v1557
        %v1638 = vunpack.c.l.b16 %v1558
        %v1639 = vunpack.c.l.b16 %v1559
        %v1640 = vunpack.c.l.b16 %v1560
        %v1641 = vunpack.c.l.b16 %v1561
        %v1642 = vunpack.c.l.b16 %v1562
        %v1643 = vunpack.c.l.b16 %v1563
        %v1644 = vunpack.c.l.b16 %v1564
        %v1645 = vunpack.c.l.b16 %v1565
        %v1646 = vunpack.c.l.b16 %v1566
        %v1647 = vunpack.c.l.b16 %v1567
        %v1648 = vunpack.c.l.b16 %v1568
        %v1649 = vunpack.c.l.b16 %v1569
        %v1650 = vunpack.c.l.b16 %v1570
        %v1651 = vunpack.c.l.b16 %v1571
        %v1652 = vunpack.c.l.b16 %v1572
        %v1653 = vunpack.c.l.b16 %v1573
        %v1654 = vunpack.c.l.b16 %v1574
        %v1655 = vunpack.c.l.b16 %v1575
        %v1656 = vunpack.c.l.b16 %v1576
        %v1657 = vunpack.c.l.b16 %v1577
        %v1658 = vunpack.c.l.b16 %v1578
        %v1659 = vunpack.c.l.b16 %v1579
        %v1660 = vunpack.c.l.b16 %v1580
        %v1661 = vunpack.c.l.b16 %v1581
        %v1662 = vunpack.c.l.b16 %v1582
        %v1663 = vunpack.c.l.b16 %v1583
        %v1664 = vunpack.c.l.b16 %v1584
        %v1665 = vpack.c.b16 %v1634, %v1633
        %v1666 = vpack.c.b16 %v1636, %v1635
        %v1667 = vpack.c.b16 %v1638, %v1637
        %v1668 = vpack.c.b16 %v1640, %v1639
        %v1669 = vpack.c.b16 %v1642, %v1641
        %v1670 = vpack.c.b16 %v1644, %v1643
        %v1671 = vpack.c.b16 %v1646, %v1645
        %v1672 = vpack.c.b16 %v1648, %v1647
        %v1673 = vpack.c.b16 %v1650, %v1649
        %v1674 = vpack.c.b16 %v1652, %v1651
        %v1675 = vpack.c.b16 %v1654, %v1653
        %v1676 = vpack.c.b16 %v1656, %v1655
        %v1677 = vpack.c.b16 %v1658, %v1657
        %v1678 = vpack.c.b16 %v1660, %v1659
        %v1679 = vpack.c.b16 %v1662, %v1661
        %v1680 = vpack.c.b16 %v1664, %v1663
        %v1713 = vunpack.c.l.b16 %v1585
        %v1714 = vunpack.c.l.b16 %v1586
        %v1715 = vunpack.c.l.b16 %v1587
        %v1716 = vunpack.c.l.b16 %v1588
        %v1717 = vunpack.c.l.b16 %v1589
        %v1718 = vunpack.c.l.b16 %v1590
        %v1719 = vunpack.c.l.b16 %v1591
        %v1720 = vunpack.c.l.b16 %v1592
        %v1721 = vunpack.c.l.b16 %v1593
        %v1722 = vunpack.c.l.b16 %v1594
        %v1723 = vunpack.c.l.b16 %v1595
        %v1724 = vunpack.c.l.b16 %v1596
        %v1725 = vunpack.c.l.b16 %v1597
        %v1726 = vunpack.c.l.b16 %v1598
        %v1727 = vunpack.c.l.b16 %v1599
        %v1728 = vunpack.c.l.b16 %v1600
        %v1729 = vpack.c.b16 %v1714, %v1713
        %v1730 = vpack.c.b16 %v1716, %v1715
        %v1731 = vpack.c.b16 %v1718, %v1717
        %v1732 = vpack.c.b16 %v1720, %v1719
        %v1733 = vpack.c.b16 %v1722, %v1721
        %v1734 = vpack.c.b16 %v1724, %v1723
        %v1735 = vpack.c.b16 %v1726, %v1725
        %v1736 = vpack.c.b16 %v1728, %v1727
        %1745 = vmatprep.subr.bf16.mxu0 0
        %1746 = vmatpush1.bf16.msra.mxu0 %v1729
        %1747 = vmatprep.subr.bf16.mxu0 0
        %1748 = vmatpush1.bf16.msra.mxu0 %v1730
        %1749 = vmatprep.subr.bf16.mxu0 0
        %1750 = vmatpush1.bf16.msra.mxu0 %v1731
        %1751 = vmatprep.subr.bf16.mxu0 0
        %1752 = vmatpush1.bf16.msra.mxu0 %v1732
        %1753 = vmatprep.subr.bf16.mxu0 0
        %1754 = vmatpush1.bf16.msra.mxu0 %v1733
        %1755 = vmatprep.subr.bf16.mxu0 0
        %1756 = vmatpush1.bf16.msra.mxu0 %v1734
        %1757 = vmatprep.subr.bf16.mxu0 0
        %1758 = vmatpush1.bf16.msra.mxu0 %v1735
        %1759 = vmatprep.subr.bf16.mxu0 0
        %1760 = vmatpush1.bf16.msra.mxu0 %v1736
        %1761 = vmatprep.subr.bf16.mxu0 0
        %1762 = vmatpush1.bf16.msra.mxu0 0
        %1763 = vmatprep.subr.bf16.mxu0 0
        %1764 = vmatpush1.bf16.msra.mxu0 0
        %1765 = vmatprep.subr.bf16.mxu0 0
        %1766 = vmatpush1.bf16.msra.mxu0 0
        %1767 = vmatprep.subr.bf16.mxu0 0
        %1768 = vmatpush1.bf16.msra.mxu0 0
        %1769 = vmatprep.subr.bf16.mxu0 0
        %1770 = vmatpush1.bf16.msra.mxu0 0
        %1771 = vmatprep.subr.bf16.mxu0 0
        %1772 = vmatpush1.bf16.msra.mxu0 0
        %1773 = vmatprep.subr.bf16.mxu0 0
        %1774 = vmatpush1.bf16.msra.mxu0 0
        %1775 = vmatprep.subr.bf16.mxu0 0
        %1776 = vmatpush1.bf16.msra.mxu0 0
        %1777 = vmatprep.mubr.bf16.mxu0 0
        %1778 = vmatmul.mubr.bf16.gmra.mrb[0].mxu0 %v1665
        %v1779 = vpop.f32.mrb[0].mxu0
        %v1780 = vadd.f32 0.0, %v1779
        %v1781 = vpop.f32.mrb[0].mxu0
        %v1782 = vpop.f32.mrb[0].mxu0
        %v1783 = vadd.f32 0.0, %v1782
        %v1784 = vpop.f32.mrb[0].mxu0
        %1785 = vmatprep.mubr.bf16.mxu0 0
        %1786 = vmatmul.mubr.bf16.gmra.mrb[0].mxu0 %v1666
        %v1787 = vpop.f32.mrb[0].mxu0
        %v1788 = vadd.f32 0.0, %v1787
        %v1789 = vpop.f32.mrb[0].mxu0
        %v1790 = vpop.f32.mrb[0].mxu0
        %v1791 = vadd.f32 0.0, %v1790
        %v1792 = vpop.f32.mrb[0].mxu0
        %1793 = vmatprep.mubr.bf16.mxu0 0
        %1794 = vmatmul.mubr.bf16.gmra.mrb[0].mxu0 %v1667
        %v1795 = vpop.f32.mrb[0].mxu0
        %v1796 = vadd.f32 0.0, %v1795
        %v1797 = vpop.f32.mrb[0].mxu0
        %v1798 = vpop.f32.mrb[0].mxu0
        %v1799 = vadd.f32 0.0, %v1798
        %v1800 = vpop.f32.mrb[0].mxu0
        %1801 = vmatprep.mubr.bf16.mxu0 0
        %1802 = vmatmul.mubr.bf16.gmra.mrb[0].mxu0 %v1668
        %v1803 = vpop.f32.mrb[0].mxu0
        %v1804 = vadd.f32 0.0, %v1803
        %v1805 = vpop.f32.mrb[0].mxu0
        %v1806 = vpop.f32.mrb[0].mxu0
        %v1807 = vadd.f32 0.0, %v1806
        %v1808 = vpop.f32.mrb[0].mxu0
        %1809 = vmatprep.mubr.bf16.mxu0 0
        %1810 = vmatmul.mubr.bf16.gmra.mrb[0].mxu0 %v1669
        %v1811 = vpop.f32.mrb[0].mxu0
        %v1812 = vadd.f32 0.0, %v1811
        %v1813 = vpop.f32.mrb[0].mxu0
        %v1814 = vpop.f32.mrb[0].mxu0
        %v1815 = vadd.f32 0.0, %v1814
        %v1816 = vpop.f32.mrb[0].mxu0
        %1817 = vmatprep.mubr.bf16.mxu0 0
        %1818 = vmatmul.mubr.bf16.gmra.mrb[0].mxu0 %v1670
        %v1819 = vpop.f32.mrb[0].mxu0
        %v1820 = vadd.f32 0.0, %v1819
        %v1821 = vpop.f32.mrb[0].mxu0
        %v1822 = vpop.f32.mrb[0].mxu0
        %v1823 = vadd.f32 0.0, %v1822
        %v1824 = vpop.f32.mrb[0].mxu0
        %1825 = vmatprep.mubr.bf16.mxu0 0
        %1826 = vmatmul.mubr.bf16.gmra.mrb[0].mxu0 %v1671
        %v1827 = vpop.f32.mrb[0].mxu0
        %v1828 = vadd.f32 0.0, %v1827
        %v1829 = vpop.f32.mrb[0].mxu0
        %v1830 = vpop.f32.mrb[0].mxu0
        %v1831 = vadd.f32 0.0, %v1830
        %v1832 = vpop.f32.mrb[0].mxu0
        %1833 = vmatprep.mubr.bf16.mxu0 0
        %1834 = vmatmul.mubr.bf16.gmra.mrb[0].mxu0 %v1672
        %v1835 = vpop.f32.mrb[0].mxu0
        %v1836 = vadd.f32 0.0, %v1835
        %v1837 = vpop.f32.mrb[0].mxu0
        %v1838 = vpop.f32.mrb[0].mxu0
        %v1839 = vadd.f32 0.0, %v1838
        %v1840 = vpop.f32.mrb[0].mxu0
        %1841 = vmatprep.mubr.bf16.mxu0 0
        %1842 = vmatmul.mubr.bf16.gmra.mrb[0].mxu0 %v1673
        %v1843 = vpop.f32.mrb[0].mxu0
        %v1844 = vadd.f32 0.0, %v1843
        %v1845 = vpop.f32.mrb[0].mxu0
        %v1846 = vpop.f32.mrb[0].mxu0
        %v1847 = vadd.f32 0.0, %v1846
        %v1848 = vpop.f32.mrb[0].mxu0
        %1849 = vmatprep.mubr.bf16.mxu0 0
        %1850 = vmatmul.mubr.bf16.gmra.mrb[0].mxu0 %v1674
        %v1851 = vpop.f32.mrb[0].mxu0
        %v1852 = vadd.f32 0.0, %v1851
        %v1853 = vpop.f32.mrb[0].mxu0
        %v1854 = vpop.f32.mrb[0].mxu0
        %v1855 = vadd.f32 0.0, %v1854
        %v1856 = vpop.f32.mrb[0].mxu0
        %1857 = vmatprep.mubr.bf16.mxu0 0
        %1858 = vmatmul.mubr.bf16.gmra.mrb[0].mxu0 %v1675
        %v1859 = vpop.f32.mrb[0].mxu0
        %v1860 = vadd.f32 0.0, %v1859
        %v1861 = vpop.f32.mrb[0].mxu0
        %v1862 = vpop.f32.mrb[0].mxu0
        %v1863 = vadd.f32 0.0, %v1862
        %v1864 = vpop.f32.mrb[0].mxu0
        %1865 = vmatprep.mubr.bf16.mxu0 0
        %1866 = vmatmul.mubr.bf16.gmra.mrb[0].mxu0 %v1676
        %v1867 = vpop.f32.mrb[0].mxu0
        %v1868 = vadd.f32 0.0, %v1867
        %v1869 = vpop.f32.mrb[0].mxu0
        %v1870 = vpop.f32.mrb[0].mxu0
        %v1871 = vadd.f32 0.0, %v1870
        %v1872 = vpop.f32.mrb[0].mxu0
        %1873 = vmatprep.mubr.bf16.mxu0 0
        %1874 = vmatmul.mubr.bf16.gmra.mrb[0].mxu0 %v1677
        %v1875 = vpop.f32.mrb[0].mxu0
        %v1876 = vadd.f32 0.0, %v1875
        %v1877 = vpop.f32.mrb[0].mxu0
        %v1878 = vpop.f32.mrb[0].mxu0
        %v1879 = vadd.f32 0.0, %v1878
        %v1880 = vpop.f32.mrb[0].mxu0
        %1881 = vmatprep.mubr.bf16.mxu0 0
        %1882 = vmatmul.mubr.bf16.gmra.mrb[0].mxu0 %v1678
        %v1883 = vpop.f32.mrb[0].mxu0
        %v1884 = vadd.f32 0.0, %v1883
        %v1885 = vpop.f32.mrb[0].mxu0
        %v1886 = vpop.f32.mrb[0].mxu0
        %v1887 = vadd.f32 0.0, %v1886
        %v1888 = vpop.f32.mrb[0].mxu0
        %1889 = vmatprep.mubr.bf16.mxu0 0
        %1890 = vmatmul.mubr.bf16.gmra.mrb[0].mxu0 %v1679
        %v1891 = vpop.f32.mrb[0].mxu0
        %v1892 = vadd.f32 0.0, %v1891
        %v1893 = vpop.f32.mrb[0].mxu0
        %v1894 = vpop.f32.mrb[0].mxu0
        %v1895 = vadd.f32 0.0, %v1894
        %v1896 = vpop.f32.mrb[0].mxu0
        %1897 = vmatprep.mubr.bf16.mxu0 0
        %1898 = vmatmul.mubr.bf16.gmra.mrb[0].mxu0 %v1680
        %v1899 = vpop.f32.mrb[0].mxu0
        %v1900 = vadd.f32 0.0, %v1899
        %v1901 = vpop.f32.mrb[0].mxu0
        %v1902 = vpop.f32.mrb[0].mxu0
        %v1903 = vadd.f32 0.0, %v1902
        %v1904 = vpop.f32.mrb[0].mxu0
        %1905 = vdwg.mxu0
        %v1906 = vpack.c.bf16 %v1783, %v1780
        %v1907 = vpack.c.bf16 %v1791, %v1788
        %v1908 = vpack.c.bf16 %v1799, %v1796
        %v1909 = vpack.c.bf16 %v1807, %v1804
        %v1910 = vpack.c.bf16 %v1815, %v1812
        %v1911 = vpack.c.bf16 %v1823, %v1820
        %v1912 = vpack.c.bf16 %v1831, %v1828
        %v1913 = vpack.c.bf16 %v1839, %v1836
        %v1914 = vpack.c.bf16 %v1847, %v1844
        %v1915 = vpack.c.bf16 %v1855, %v1852
        %v1916 = vpack.c.bf16 %v1863, %v1860
        %v1917 = vpack.c.bf16 %v1871, %v1868
        %v1918 = vpack.c.bf16 %v1879, %v1876
        %v1919 = vpack.c.bf16 %v1887, %v1884
        %v1920 = vpack.c.bf16 %v1895, %v1892
        %v1921 = vpack.c.bf16 %v1903, %v1900
        %v1938 = vunpack.c.l.b16 %v1906
        %v1939 = vunpack.c.h.b16 %v1906
        %v1940 = vunpack.c.l.b16 %v1907
        %v1941 = vunpack.c.h.b16 %v1907
        %v1942 = vunpack.c.l.b16 %v1908
        %v1943 = vunpack.c.h.b16 %v1908
        %v1944 = vunpack.c.l.b16 %v1909
        %v1945 = vunpack.c.h.b16 %v1909
        %v1946 = vunpack.c.l.b16 %v1910
        %v1947 = vunpack.c.h.b16 %v1910
        %v1948 = vunpack.c.l.b16 %v1911
        %v1949 = vunpack.c.h.b16 %v1911
        %v1950 = vunpack.c.l.b16 %v1912
        %v1951 = vunpack.c.h.b16 %v1912
        %v1952 = vunpack.c.l.b16 %v1913
        %v1953 = vunpack.c.h.b16 %v1913
        %v1954 = vunpack.c.l.b16 %v1914
        %v1955 = vunpack.c.h.b16 %v1914
        %v1956 = vunpack.c.l.b16 %v1915
        %v1957 = vunpack.c.h.b16 %v1915
        %v1958 = vunpack.c.l.b16 %v1916
        %v1959 = vunpack.c.h.b16 %v1916
        %v1960 = vunpack.c.l.b16 %v1917
        %v1961 = vunpack.c.h.b16 %v1917
        %v1962 = vunpack.c.l.b16 %v1918
        %v1963 = vunpack.c.h.b16 %v1918
        %v1964 = vunpack.c.l.b16 %v1919
        %v1965 = vunpack.c.h.b16 %v1919
        %v1966 = vunpack.c.l.b16 %v1920
        %v1967 = vunpack.c.h.b16 %v1920
        %v1968 = vunpack.c.l.b16 %v1921
        %v1969 = vunpack.c.h.b16 %v1921
        %v1970 = vpack.c.b16 %v1938, %v1938
        %v1971 = vpack.c.b16 %v1939, %v1939
        %v1972 = vpack.c.b16 %v1940, %v1940
        %v1973 = vpack.c.b16 %v1941, %v1941
        %v1974 = vpack.c.b16 %v1942, %v1942
        %v1975 = vpack.c.b16 %v1943, %v1943
        %v1976 = vpack.c.b16 %v1944, %v1944
        %v1977 = vpack.c.b16 %v1945, %v1945
        %v1978 = vpack.c.b16 %v1946, %v1946
        %v1979 = vpack.c.b16 %v1947, %v1947
        %v1980 = vpack.c.b16 %v1948, %v1948
        %v1981 = vpack.c.b16 %v1949, %v1949
        %v1982 = vpack.c.b16 %v1950, %v1950
        %v1983 = vpack.c.b16 %v1951, %v1951
        %v1984 = vpack.c.b16 %v1952, %v1952
        %v1985 = vpack.c.b16 %v1953, %v1953
        %v1986 = vpack.c.b16 %v1954, %v1954
        %v1987 = vpack.c.b16 %v1955, %v1955
        %v1988 = vpack.c.b16 %v1956, %v1956
        %v1989 = vpack.c.b16 %v1957, %v1957
        %v1990 = vpack.c.b16 %v1958, %v1958
        %v1991 = vpack.c.b16 %v1959, %v1959
        %v1992 = vpack.c.b16 %v1960, %v1960
        %v1993 = vpack.c.b16 %v1961, %v1961
        %v1994 = vpack.c.b16 %v1962, %v1962
        %v1995 = vpack.c.b16 %v1963, %v1963
        %v1996 = vpack.c.b16 %v1964, %v1964
        %v1997 = vpack.c.b16 %v1965, %v1965
        %v1998 = vpack.c.b16 %v1966, %v1966
        %v1999 = vpack.c.b16 %v1967, %v1967
        %v2000 = vpack.c.b16 %v1968, %v1968
        %v2001 = vpack.c.b16 %v1969, %v1969
        %s2034 = scalar_lea.vmem %s276, 64 [#allocation7]
        %2035 = vst [vmem:[%s2034] sm:$0xf] %v1970
        %2036 = vst [vmem:[%s2034 + $0x4] sm:$0xf] %v1971
        %2037 = vst [vmem:[%s2034 + $0x8] sm:$0xf] %v1972
        %2038 = vst [vmem:[%s2034 + $0xc] sm:$0xf] %v1973
        %2039 = vst [vmem:[%s2034 + $0x10] sm:$0xf] %v1974
        %2040 = vst [vmem:[%s2034 + $0x14] sm:$0xf] %v1975
        %2041 = vst [vmem:[%s2034 + $0x18] sm:$0xf] %v1976
        %2042 = vst [vmem:[%s2034 + $0x1c] sm:$0xf] %v1977
        %2043 = vst [vmem:[%s2034 + $0x80] sm:$0xf] %v1978
        %2044 = vst [vmem:[%s2034 + $0x84] sm:$0xf] %v1979
        %2045 = vst [vmem:[%s2034 + $0x88] sm:$0xf] %v1980
        %2046 = vst [vmem:[%s2034 + $0x8c] sm:$0xf] %v1981
        %2047 = vst [vmem:[%s2034 + $0x90] sm:$0xf] %v1982
        %2048 = vst [vmem:[%s2034 + $0x94] sm:$0xf] %v1983
        %2049 = vst [vmem:[%s2034 + $0x98] sm:$0xf] %v1984
        %2050 = vst [vmem:[%s2034 + $0x9c] sm:$0xf] %v1985
        %2051 = vst [vmem:[%s2034 + $0x100] sm:$0xf] %v1986
        %2052 = vst [vmem:[%s2034 + $0x104] sm:$0xf] %v1987
        %2053 = vst [vmem:[%s2034 + $0x108] sm:$0xf] %v1988
        %2054 = vst [vmem:[%s2034 + $0x10c] sm:$0xf] %v1989
        %2055 = vst [vmem:[%s2034 + $0x110] sm:$0xf] %v1990
        %2056 = vst [vmem:[%s2034 + $0x114] sm:$0xf] %v1991
        %2057 = vst [vmem:[%s2034 + $0x118] sm:$0xf] %v1992
        %2058 = vst [vmem:[%s2034 + $0x11c] sm:$0xf] %v1993
        %2059 = vst [vmem:[%s2034 + $0x180] sm:$0xf] %v1994
        %2060 = vst [vmem:[%s2034 + $0x184] sm:$0xf] %v1995
        %2061 = vst [vmem:[%s2034 + $0x188] sm:$0xf] %v1996
        %2062 = vst [vmem:[%s2034 + $0x18c] sm:$0xf] %v1997
        %2063 = vst [vmem:[%s2034 + $0x190] sm:$0xf] %v1998
        %2064 = vst [vmem:[%s2034 + $0x194] sm:$0xf] %v1999
        %2065 = vst [vmem:[%s2034 + $0x198] sm:$0xf] %v2000
        %2066 = vst [vmem:[%s2034 + $0x19c] sm:$0xf] %v2001
        %v2067 = vld [vmem:[%s282] sm:$0x1]
        %v2068 = vadd.f32 %v1780, %v1783
        %v2069 = vadd.f32 %v2068, %v1788
        %v2070 = vadd.f32 %v2069, %v1791
        %v2071 = vadd.f32 %v2070, %v1796
        %v2072 = vadd.f32 %v2071, %v1799
        %v2073 = vadd.f32 %v2072, %v1804
        %v2074 = vadd.f32 %v2073, %v1807
        %v2075 = vadd.f32 %v2074, %v1812
        %v2076 = vadd.f32 %v2075, %v1815
        %v2077 = vadd.f32 %v2076, %v1820
        %v2078 = vadd.f32 %v2077, %v1823
        %v2079 = vadd.f32 %v2078, %v1828
        %v2080 = vadd.f32 %v2079, %v1831
        %v2081 = vadd.f32 %v2080, %v1836
        %v2082 = vadd.f32 %v2081, %v1839
        %v2083 = vadd.f32 %v2082, %v1844
        %v2084 = vadd.f32 %v2083, %v1847
        %v2085 = vadd.f32 %v2084, %v1852
        %v2086 = vadd.f32 %v2085, %v1855
        %v2087 = vadd.f32 %v2086, %v1860
        %v2088 = vadd.f32 %v2087, %v1863
        %v2089 = vadd.f32 %v2088, %v1868
        %v2090 = vadd.f32 %v2089, %v1871
        %v2091 = vadd.f32 %v2090, %v1876
        %v2092 = vadd.f32 %v2091, %v1879
        %v2093 = vadd.f32 %v2092, %v1884
        %v2094 = vadd.f32 %v2093, %v1887
        %v2095 = vadd.f32 %v2094, %v1892
        %v2096 = vadd.f32 %v2095, %v1895
        %v2097 = vadd.f32 %v2096, %v1900
        %v2098 = vadd.f32 %v2097, %v1903
        %v2099 = vrot.slane %v2098, 4
        %v2100 = vadd.f32 %v2098, %v2099
        %v2101 = vrot.slane %v2100, 2
        %v2102 = vadd.f32 %v2100, %v2101
        %v2103 = vrot.slane %v2102, 1
        %v2104 = vadd.f32 %v2102, %v2103
        %v2105 = vadd.f32 %v2067, %v2104
        %2106 = vst [vmem:[%s282] sm:$0x1] %v2105
        %v2107 = vld [vmem:[%s288] sm:$0x1]
        %v2108 = vmul.f32 %v1780, %v1780
        %v2109 = vmul.f32 %v1783, %v1783
        %v2110 = vmul.f32 %v1788, %v1788
        %v2111 = vmul.f32 %v1791, %v1791
        %v2112 = vmul.f32 %v1796, %v1796
        %v2113 = vmul.f32 %v1799, %v1799
        %v2114 = vmul.f32 %v1804, %v1804
        %v2115 = vmul.f32 %v1807, %v1807
        %v2116 = vmul.f32 %v1812, %v1812
        %v2117 = vmul.f32 %v1815, %v1815
        %v2118 = vmul.f32 %v1820, %v1820
        %v2119 = vmul.f32 %v1823, %v1823
        %v2120 = vmul.f32 %v1828, %v1828
        %v2121 = vmul.f32 %v1831, %v1831
        %v2122 = vmul.f32 %v1836, %v1836
        %v2123 = vmul.f32 %v1839, %v1839
        %v2124 = vmul.f32 %v1844, %v1844
        %v2125 = vmul.f32 %v1847, %v1847
        %v2126 = vmul.f32 %v1852, %v1852
        %v2127 = vmul.f32 %v1855, %v1855
        %v2128 = vmul.f32 %v1860, %v1860
        %v2129 = vmul.f32 %v1863, %v1863
        %v2130 = vmul.f32 %v1868, %v1868
        %v2131 = vmul.f32 %v1871, %v1871
        %v2132 = vmul.f32 %v1876, %v1876
        %v2133 = vmul.f32 %v1879, %v1879
        %v2134 = vmul.f32 %v1884, %v1884
        %v2135 = vmul.f32 %v1887, %v1887
        %v2136 = vmul.f32 %v1892, %v1892
        %v2137 = vmul.f32 %v1895, %v1895
        %v2138 = vmul.f32 %v1900, %v1900
        %v2139 = vmul.f32 %v1903, %v1903
        %v2140 = vadd.f32 %v2108, %v2109
        %v2141 = vadd.f32 %v2140, %v2110
        %v2142 = vadd.f32 %v2141, %v2111
        %v2143 = vadd.f32 %v2142, %v2112
        %v2144 = vadd.f32 %v2143, %v2113
        %v2145 = vadd.f32 %v2144, %v2114
        %v2146 = vadd.f32 %v2145, %v2115
        %v2147 = vadd.f32 %v2146, %v2116
        %v2148 = vadd.f32 %v2147, %v2117
        %v2149 = vadd.f32 %v2148, %v2118
        %v2150 = vadd.f32 %v2149, %v2119
        %v2151 = vadd.f32 %v2150, %v2120
        %v2152 = vadd.f32 %v2151, %v2121
        %v2153 = vadd.f32 %v2152, %v2122
        %v2154 = vadd.f32 %v2153, %v2123
        %v2155 = vadd.f32 %v2154, %v2124
        %v2156 = vadd.f32 %v2155, %v2125
        %v2157 = vadd.f32 %v2156, %v2126
        %v2158 = vadd.f32 %v2157, %v2127
        %v2159 = vadd.f32 %v2158, %v2128
        %v2160 = vadd.f32 %v2159, %v2129
        %v2161 = vadd.f32 %v2160, %v2130
        %v2162 = vadd.f32 %v2161, %v2131
        %v2163 = vadd.f32 %v2162, %v2132
        %v2164 = vadd.f32 %v2163, %v2133
        %v2165 = vadd.f32 %v2164, %v2134
        %v2166 = vadd.f32 %v2165, %v2135
        %v2167 = vadd.f32 %v2166, %v2136
        %v2168 = vadd.f32 %v2167, %v2137
        %v2169 = vadd.f32 %v2168, %v2138
        %v2170 = vadd.f32 %v2169, %v2139
        %v2171 = vrot.slane %v2170, 4
        %v2172 = vadd.f32 %v2170, %v2171
        %v2173 = vrot.slane %v2172, 2
        %v2174 = vadd.f32 %v2172, %v2173
        %v2175 = vrot.slane %v2174, 1
        %v2176 = vadd.f32 %v2174, %v2175
        %v2177 = vadd.f32 %v2107, %v2176
        %2178 = vst [vmem:[%s288] sm:$0x1] %v2177
        %s2179 = scalar_lea.vmem %s252, 96 [#allocation2]
        %v2180 = vld [vmem:[%s2179] sm:$0xf]
        %v2181 = vld [vmem:[%s2179 + $0x4] sm:$0xf]
        %v2182 = vld [vmem:[%s2179 + $0x8] sm:$0xf]
        %v2183 = vld [vmem:[%s2179 + $0xc] sm:$0xf]
        %v2184 = vld [vmem:[%s2179 + $0x10] sm:$0xf]
        %v2185 = vld [vmem:[%s2179 + $0x14] sm:$0xf]
        %v2186 = vld [vmem:[%s2179 + $0x18] sm:$0xf]
        %v2187 = vld [vmem:[%s2179 + $0x1c] sm:$0xf]
        %v2188 = vld [vmem:[%s2179 + $0x80] sm:$0xf]
        %v2189 = vld [vmem:[%s2179 + $0x84] sm:$0xf]
        %v2190 = vld [vmem:[%s2179 + $0x88] sm:$0xf]
        %v2191 = vld [vmem:[%s2179 + $0x8c] sm:$0xf]
        %v2192 = vld [vmem:[%s2179 + $0x90] sm:$0xf]
        %v2193 = vld [vmem:[%s2179 + $0x94] sm:$0xf]
        %v2194 = vld [vmem:[%s2179 + $0x98] sm:$0xf]
        %v2195 = vld [vmem:[%s2179 + $0x9c] sm:$0xf]
        %v2196 = vld [vmem:[%s2179 + $0x100] sm:$0xf]
        %v2197 = vld [vmem:[%s2179 + $0x104] sm:$0xf]
        %v2198 = vld [vmem:[%s2179 + $0x108] sm:$0xf]
        %v2199 = vld [vmem:[%s2179 + $0x10c] sm:$0xf]
        %v2200 = vld [vmem:[%s2179 + $0x110] sm:$0xf]
        %v2201 = vld [vmem:[%s2179 + $0x114] sm:$0xf]
        %v2202 = vld [vmem:[%s2179 + $0x118] sm:$0xf]
        %v2203 = vld [vmem:[%s2179 + $0x11c] sm:$0xf]
        %v2204 = vld [vmem:[%s2179 + $0x180] sm:$0xf]
        %v2205 = vld [vmem:[%s2179 + $0x184] sm:$0xf]
        %v2206 = vld [vmem:[%s2179 + $0x188] sm:$0xf]
        %v2207 = vld [vmem:[%s2179 + $0x18c] sm:$0xf]
        %v2208 = vld [vmem:[%s2179 + $0x190] sm:$0xf]
        %v2209 = vld [vmem:[%s2179 + $0x194] sm:$0xf]
        %v2210 = vld [vmem:[%s2179 + $0x198] sm:$0xf]
        %v2211 = vld [vmem:[%s2179 + $0x19c] sm:$0xf]
        %v2212 = vld [vmem:[#allocation5] sm:$0xf]
        %v2213 = vld [vmem:[#allocation5 + $0x4] sm:$0xf]
        %v2214 = vld [vmem:[#allocation5 + $0x8] sm:$0xf]
        %v2215 = vld [vmem:[#allocation5 + $0xc] sm:$0xf]
        %v2216 = vld [vmem:[#allocation5 + $0x10] sm:$0xf]
        %v2217 = vld [vmem:[#allocation5 + $0x14] sm:$0xf]
        %v2218 = vld [vmem:[#allocation5 + $0x18] sm:$0xf]
        %v2219 = vld [vmem:[#allocation5 + $0x1c] sm:$0xf]
        %v2220 = vld [vmem:[#allocation5 + $0x20] sm:$0xf]
        %v2221 = vld [vmem:[#allocation5 + $0x24] sm:$0xf]
        %v2222 = vld [vmem:[#allocation5 + $0x28] sm:$0xf]
        %v2223 = vld [vmem:[#allocation5 + $0x2c] sm:$0xf]
        %v2224 = vld [vmem:[#allocation5 + $0x30] sm:$0xf]
        %v2225 = vld [vmem:[#allocation5 + $0x34] sm:$0xf]
        %v2226 = vld [vmem:[#allocation5 + $0x38] sm:$0xf]
        %v2227 = vld [vmem:[#allocation5 + $0x3c] sm:$0xf]
        %v2260 = vunpack.c.l.b16 %v2180
        %v2261 = vunpack.c.l.b16 %v2181
        %v2262 = vunpack.c.l.b16 %v2182
        %v2263 = vunpack.c.l.b16 %v2183
        %v2264 = vunpack.c.l.b16 %v2184
        %v2265 = vunpack.c.l.b16 %v2185
        %v2266 = vunpack.c.l.b16 %v2186
        %v2267 = vunpack.c.l.b16 %v2187
        %v2268 = vunpack.c.l.b16 %v2188
        %v2269 = vunpack.c.l.b16 %v2189
        %v2270 = vunpack.c.l.b16 %v2190
        %v2271 = vunpack.c.l.b16 %v2191
        %v2272 = vunpack.c.l.b16 %v2192
        %v2273 = vunpack.c.l.b16 %v2193
        %v2274 = vunpack.c.l.b16 %v2194
        %v2275 = vunpack.c.l.b16 %v2195
        %v2276 = vunpack.c.l.b16 %v2196
        %v2277 = vunpack.c.l.b16 %v2197
        %v2278 = vunpack.c.l.b16 %v2198
        %v2279 = vunpack.c.l.b16 %v2199
        %v2280 = vunpack.c.l.b16 %v2200
        %v2281 = vunpack.c.l.b16 %v2201
        %v2282 = vunpack.c.l.b16 %v2202
        %v2283 = vunpack.c.l.b16 %v2203
        %v2284 = vunpack.c.l.b16 %v2204
        %v2285 = vunpack.c.l.b16 %v2205
        %v2286 = vunpack.c.l.b16 %v2206
        %v2287 = vunpack.c.l.b16 %v2207
        %v2288 = vunpack.c.l.b16 %v2208
        %v2289 = vunpack.c.l.b16 %v2209
        %v2290 = vunpack.c.l.b16 %v2210
        %v2291 = vunpack.c.l.b16 %v2211
        %v2292 = vpack.c.b16 %v2261, %v2260
        %v2293 = vpack.c.b16 %v2263, %v2262
        %v2294 = vpack.c.b16 %v2265, %v2264
        %v2295 = vpack.c.b16 %v2267, %v2266
        %v2296 = vpack.c.b16 %v2269, %v2268
        %v2297 = vpack.c.b16 %v2271, %v2270
        %v2298 = vpack.c.b16 %v2273, %v2272
        %v2299 = vpack.c.b16 %v2275, %v2274
        %v2300 = vpack.c.b16 %v2277, %v2276
        %v2301 = vpack.c.b16 %v2279, %v2278
        %v2302 = vpack.c.b16 %v2281, %v2280
        %v2303 = vpack.c.b16 %v2283, %v2282
        %v2304 = vpack.c.b16 %v2285, %v2284
        %v2305 = vpack.c.b16 %v2287, %v2286
        %v2306 = vpack.c.b16 %v2289, %v2288
        %v2307 = vpack.c.b16 %v2291, %v2290
        %v2340 = vunpack.c.l.b16 %v2212
        %v2341 = vunpack.c.l.b16 %v2213
        %v2342 = vunpack.c.l.b16 %v2214
        %v2343 = vunpack.c.l.b16 %v2215
        %v2344 = vunpack.c.l.b16 %v2216
        %v2345 = vunpack.c.l.b16 %v2217
        %v2346 = vunpack.c.l.b16 %v2218
        %v2347 = vunpack.c.l.b16 %v2219
        %v2348 = vunpack.c.l.b16 %v2220
        %v2349 = vunpack.c.l.b16 %v2221
        %v2350 = vunpack.c.l.b16 %v2222
        %v2351 = vunpack.c.l.b16 %v2223
        %v2352 = vunpack.c.l.b16 %v2224
        %v2353 = vunpack.c.l.b16 %v2225
        %v2354 = vunpack.c.l.b16 %v2226
        %v2355 = vunpack.c.l.b16 %v2227
        %v2356 = vpack.c.b16 %v2341, %v2340
        %v2357 = vpack.c.b16 %v2343, %v2342
        %v2358 = vpack.c.b16 %v2345, %v2344
        %v2359 = vpack.c.b16 %v2347, %v2346
        %v2360 = vpack.c.b16 %v2349, %v2348
        %v2361 = vpack.c.b16 %v2351, %v2350
        %v2362 = vpack.c.b16 %v2353, %v2352
        %v2363 = vpack.c.b16 %v2355, %v2354
        %2372 = vmatprep.subr.bf16.mxu0 0
        %2373 = vmatpush1.bf16.msra.mxu0 %v2356
        %2374 = vmatprep.subr.bf16.mxu0 0
        %2375 = vmatpush1.bf16.msra.mxu0 %v2357
        %2376 = vmatprep.subr.bf16.mxu0 0
        %2377 = vmatpush1.bf16.msra.mxu0 %v2358
        %2378 = vmatprep.subr.bf16.mxu0 0
        %2379 = vmatpush1.bf16.msra.mxu0 %v2359
        %2380 = vmatprep.subr.bf16.mxu0 0
        %2381 = vmatpush1.bf16.msra.mxu0 %v2360
        %2382 = vmatprep.subr.bf16.mxu0 0
        %2383 = vmatpush1.bf16.msra.mxu0 %v2361
        %2384 = vmatprep.subr.bf16.mxu0 0
        %2385 = vmatpush1.bf16.msra.mxu0 %v2362
        %2386 = vmatprep.subr.bf16.mxu0 0
        %2387 = vmatpush1.bf16.msra.mxu0 %v2363
        %2388 = vmatprep.subr.bf16.mxu0 0
        %2389 = vmatpush1.bf16.msra.mxu0 0
        %2390 = vmatprep.subr.bf16.mxu0 0
        %2391 = vmatpush1.bf16.msra.mxu0 0
        %2392 = vmatprep.subr.bf16.mxu0 0
        %2393 = vmatpush1.bf16.msra.mxu0 0
        %2394 = vmatprep.subr.bf16.mxu0 0
        %2395 = vmatpush1.bf16.msra.mxu0 0
        %2396 = vmatprep.subr.bf16.mxu0 0
        %2397 = vmatpush1.bf16.msra.mxu0 0
        %2398 = vmatprep.subr.bf16.mxu0 0
        %2399 = vmatpush1.bf16.msra.mxu0 0
        %2400 = vmatprep.subr.bf16.mxu0 0
        %2401 = vmatpush1.bf16.msra.mxu0 0
        %2402 = vmatprep.subr.bf16.mxu0 0
        %2403 = vmatpush1.bf16.msra.mxu0 0
        %2404 = vmatprep.mubr.bf16.mxu0 0
        %2405 = vmatmul.mubr.bf16.gmra.mrb[0].mxu0 %v2292
        %v2406 = vpop.f32.mrb[0].mxu0
        %v2407 = vadd.f32 0.0, %v2406
        %v2408 = vpop.f32.mrb[0].mxu0
        %v2409 = vpop.f32.mrb[0].mxu0
        %v2410 = vadd.f32 0.0, %v2409
        %v2411 = vpop.f32.mrb[0].mxu0
        %2412 = vmatprep.mubr.bf16.mxu0 0
        %2413 = vmatmul.mubr.bf16.gmra.mrb[0].mxu0 %v2293
        %v2414 = vpop.f32.mrb[0].mxu0
        %v2415 = vadd.f32 0.0, %v2414
        %v2416 = vpop.f32.mrb[0].mxu0
        %v2417 = vpop.f32.mrb[0].mxu0
        %v2418 = vadd.f32 0.0, %v2417
        %v2419 = vpop.f32.mrb[0].mxu0
        %2420 = vmatprep.mubr.bf16.mxu0 0
        %2421 = vmatmul.mubr.bf16.gmra.mrb[0].mxu0 %v2294
        %v2422 = vpop.f32.mrb[0].mxu0
        %v2423 = vadd.f32 0.0, %v2422
        %v2424 = vpop.f32.mrb[0].mxu0
        %v2425 = vpop.f32.mrb[0].mxu0
        %v2426 = vadd.f32 0.0, %v2425
        %v2427 = vpop.f32.mrb[0].mxu0
        %2428 = vmatprep.mubr.bf16.mxu0 0
        %2429 = vmatmul.mubr.bf16.gmra.mrb[0].mxu0 %v2295
        %v2430 = vpop.f32.mrb[0].mxu0
        %v2431 = vadd.f32 0.0, %v2430
        %v2432 = vpop.f32.mrb[0].mxu0
        %v2433 = vpop.f32.mrb[0].mxu0
        %v2434 = vadd.f32 0.0, %v2433
        %v2435 = vpop.f32.mrb[0].mxu0
        %2436 = vmatprep.mubr.bf16.mxu0 0
        %2437 = vmatmul.mubr.bf16.gmra.mrb[0].mxu0 %v2296
        %v2438 = vpop.f32.mrb[0].mxu0
        %v2439 = vadd.f32 0.0, %v2438
        %v2440 = vpop.f32.mrb[0].mxu0
        %v2441 = vpop.f32.mrb[0].mxu0
        %v2442 = vadd.f32 0.0, %v2441
        %v2443 = vpop.f32.mrb[0].mxu0
        %2444 = vmatprep.mubr.bf16.mxu0 0
        %2445 = vmatmul.mubr.bf16.gmra.mrb[0].mxu0 %v2297
        %v2446 = vpop.f32.mrb[0].mxu0
        %v2447 = vadd.f32 0.0, %v2446
        %v2448 = vpop.f32.mrb[0].mxu0
        %v2449 = vpop.f32.mrb[0].mxu0
        %v2450 = vadd.f32 0.0, %v2449
        %v2451 = vpop.f32.mrb[0].mxu0
        %2452 = vmatprep.mubr.bf16.mxu0 0
        %2453 = vmatmul.mubr.bf16.gmra.mrb[0].mxu0 %v2298
        %v2454 = vpop.f32.mrb[0].mxu0
        %v2455 = vadd.f32 0.0, %v2454
        %v2456 = vpop.f32.mrb[0].mxu0
        %v2457 = vpop.f32.mrb[0].mxu0
        %v2458 = vadd.f32 0.0, %v2457
        %v2459 = vpop.f32.mrb[0].mxu0
        %2460 = vmatprep.mubr.bf16.mxu0 0
        %2461 = vmatmul.mubr.bf16.gmra.mrb[0].mxu0 %v2299
        %v2462 = vpop.f32.mrb[0].mxu0
        %v2463 = vadd.f32 0.0, %v2462
        %v2464 = vpop.f32.mrb[0].mxu0
        %v2465 = vpop.f32.mrb[0].mxu0
        %v2466 = vadd.f32 0.0, %v2465
        %v2467 = vpop.f32.mrb[0].mxu0
        %2468 = vmatprep.mubr.bf16.mxu0 0
        %2469 = vmatmul.mubr.bf16.gmra.mrb[0].mxu0 %v2300
        %v2470 = vpop.f32.mrb[0].mxu0
        %v2471 = vadd.f32 0.0, %v2470
        %v2472 = vpop.f32.mrb[0].mxu0
        %v2473 = vpop.f32.mrb[0].mxu0
        %v2474 = vadd.f32 0.0, %v2473
        %v2475 = vpop.f32.mrb[0].mxu0
        %2476 = vmatprep.mubr.bf16.mxu0 0
        %2477 = vmatmul.mubr.bf16.gmra.mrb[0].mxu0 %v2301
        %v2478 = vpop.f32.mrb[0].mxu0
        %v2479 = vadd.f32 0.0, %v2478
        %v2480 = vpop.f32.mrb[0].mxu0
        %v2481 = vpop.f32.mrb[0].mxu0
        %v2482 = vadd.f32 0.0, %v2481
        %v2483 = vpop.f32.mrb[0].mxu0
        %2484 = vmatprep.mubr.bf16.mxu0 0
        %2485 = vmatmul.mubr.bf16.gmra.mrb[0].mxu0 %v2302
        %v2486 = vpop.f32.mrb[0].mxu0
        %v2487 = vadd.f32 0.0, %v2486
        %v2488 = vpop.f32.mrb[0].mxu0
        %v2489 = vpop.f32.mrb[0].mxu0
        %v2490 = vadd.f32 0.0, %v2489
        %v2491 = vpop.f32.mrb[0].mxu0
        %2492 = vmatprep.mubr.bf16.mxu0 0
        %2493 = vmatmul.mubr.bf16.gmra.mrb[0].mxu0 %v2303
        %v2494 = vpop.f32.mrb[0].mxu0
        %v2495 = vadd.f32 0.0, %v2494
        %v2496 = vpop.f32.mrb[0].mxu0
        %v2497 = vpop.f32.mrb[0].mxu0
        %v2498 = vadd.f32 0.0, %v2497
        %v2499 = vpop.f32.mrb[0].mxu0
        %2500 = vmatprep.mubr.bf16.mxu0 0
        %2501 = vmatmul.mubr.bf16.gmra.mrb[0].mxu0 %v2304
        %v2502 = vpop.f32.mrb[0].mxu0
        %v2503 = vadd.f32 0.0, %v2502
        %v2504 = vpop.f32.mrb[0].mxu0
        %v2505 = vpop.f32.mrb[0].mxu0
        %v2506 = vadd.f32 0.0, %v2505
        %v2507 = vpop.f32.mrb[0].mxu0
        %2508 = vmatprep.mubr.bf16.mxu0 0
        %2509 = vmatmul.mubr.bf16.gmra.mrb[0].mxu0 %v2305
        %v2510 = vpop.f32.mrb[0].mxu0
        %v2511 = vadd.f32 0.0, %v2510
        %v2512 = vpop.f32.mrb[0].mxu0
        %v2513 = vpop.f32.mrb[0].mxu0
        %v2514 = vadd.f32 0.0, %v2513
        %v2515 = vpop.f32.mrb[0].mxu0
        %2516 = vmatprep.mubr.bf16.mxu0 0
        %2517 = vmatmul.mubr.bf16.gmra.mrb[0].mxu0 %v2306
        %v2518 = vpop.f32.mrb[0].mxu0
        %v2519 = vadd.f32 0.0, %v2518
        %v2520 = vpop.f32.mrb[0].mxu0
        %v2521 = vpop.f32.mrb[0].mxu0
        %v2522 = vadd.f32 0.0, %v2521
        %v2523 = vpop.f32.mrb[0].mxu0
        %2524 = vmatprep.mubr.bf16.mxu0 0
        %2525 = vmatmul.mubr.bf16.gmra.mrb[0].mxu0 %v2307
        %v2526 = vpop.f32.mrb[0].mxu0
        %v2527 = vadd.f32 0.0, %v2526
        %v2528 = vpop.f32.mrb[0].mxu0
        %v2529 = vpop.f32.mrb[0].mxu0
        %v2530 = vadd.f32 0.0, %v2529
        %v2531 = vpop.f32.mrb[0].mxu0
        %2532 = vdwg.mxu0
        %v2533 = vpack.c.bf16 %v2410, %v2407
        %v2534 = vpack.c.bf16 %v2418, %v2415
        %v2535 = vpack.c.bf16 %v2426, %v2423
        %v2536 = vpack.c.bf16 %v2434, %v2431
        %v2537 = vpack.c.bf16 %v2442, %v2439
        %v2538 = vpack.c.bf16 %v2450, %v2447
        %v2539 = vpack.c.bf16 %v2458, %v2455
        %v2540 = vpack.c.bf16 %v2466, %v2463
        %v2541 = vpack.c.bf16 %v2474, %v2471
        %v2542 = vpack.c.bf16 %v2482, %v2479
        %v2543 = vpack.c.bf16 %v2490, %v2487
        %v2544 = vpack.c.bf16 %v2498, %v2495
        %v2545 = vpack.c.bf16 %v2506, %v2503
        %v2546 = vpack.c.bf16 %v2514, %v2511
        %v2547 = vpack.c.bf16 %v2522, %v2519
        %v2548 = vpack.c.bf16 %v2530, %v2527
        %v2565 = vunpack.c.l.b16 %v2533
        %v2566 = vunpack.c.h.b16 %v2533
        %v2567 = vunpack.c.l.b16 %v2534
        %v2568 = vunpack.c.h.b16 %v2534
        %v2569 = vunpack.c.l.b16 %v2535
        %v2570 = vunpack.c.h.b16 %v2535
        %v2571 = vunpack.c.l.b16 %v2536
        %v2572 = vunpack.c.h.b16 %v2536
        %v2573 = vunpack.c.l.b16 %v2537
        %v2574 = vunpack.c.h.b16 %v2537
        %v2575 = vunpack.c.l.b16 %v2538
        %v2576 = vunpack.c.h.b16 %v2538
        %v2577 = vunpack.c.l.b16 %v2539
        %v2578 = vunpack.c.h.b16 %v2539
        %v2579 = vunpack.c.l.b16 %v2540
        %v2580 = vunpack.c.h.b16 %v2540
        %v2581 = vunpack.c.l.b16 %v2541
        %v2582 = vunpack.c.h.b16 %v2541
        %v2583 = vunpack.c.l.b16 %v2542
        %v2584 = vunpack.c.h.b16 %v2542
        %v2585 = vunpack.c.l.b16 %v2543
        %v2586 = vunpack.c.h.b16 %v2543
        %v2587 = vunpack.c.l.b16 %v2544
        %v2588 = vunpack.c.h.b16 %v2544
        %v2589 = vunpack.c.l.b16 %v2545
        %v2590 = vunpack.c.h.b16 %v2545
        %v2591 = vunpack.c.l.b16 %v2546
        %v2592 = vunpack.c.h.b16 %v2546
        %v2593 = vunpack.c.l.b16 %v2547
        %v2594 = vunpack.c.h.b16 %v2547
        %v2595 = vunpack.c.l.b16 %v2548
        %v2596 = vunpack.c.h.b16 %v2548
        %v2597 = vpack.c.b16 %v2565, %v2565
        %v2598 = vpack.c.b16 %v2566, %v2566
        %v2599 = vpack.c.b16 %v2567, %v2567
        %v2600 = vpack.c.b16 %v2568, %v2568
        %v2601 = vpack.c.b16 %v2569, %v2569
        %v2602 = vpack.c.b16 %v2570, %v2570
        %v2603 = vpack.c.b16 %v2571, %v2571
        %v2604 = vpack.c.b16 %v2572, %v2572
        %v2605 = vpack.c.b16 %v2573, %v2573
        %v2606 = vpack.c.b16 %v2574, %v2574
        %v2607 = vpack.c.b16 %v2575, %v2575
        %v2608 = vpack.c.b16 %v2576, %v2576
        %v2609 = vpack.c.b16 %v2577, %v2577
        %v2610 = vpack.c.b16 %v2578, %v2578
        %v2611 = vpack.c.b16 %v2579, %v2579
        %v2612 = vpack.c.b16 %v2580, %v2580
        %v2613 = vpack.c.b16 %v2581, %v2581
        %v2614 = vpack.c.b16 %v2582, %v2582
        %v2615 = vpack.c.b16 %v2583, %v2583
        %v2616 = vpack.c.b16 %v2584, %v2584
        %v2617 = vpack.c.b16 %v2585, %v2585
        %v2618 = vpack.c.b16 %v2586, %v2586
        %v2619 = vpack.c.b16 %v2587, %v2587
        %v2620 = vpack.c.b16 %v2588, %v2588
        %v2621 = vpack.c.b16 %v2589, %v2589
        %v2622 = vpack.c.b16 %v2590, %v2590
        %v2623 = vpack.c.b16 %v2591, %v2591
        %v2624 = vpack.c.b16 %v2592, %v2592
        %v2625 = vpack.c.b16 %v2593, %v2593
        %v2626 = vpack.c.b16 %v2594, %v2594
        %v2627 = vpack.c.b16 %v2595, %v2595
        %v2628 = vpack.c.b16 %v2596, %v2596
        %s2661 = scalar_lea.vmem %s276, 96 [#allocation7]
        %2662 = vst [vmem:[%s2661] sm:$0xf] %v2597
        %2663 = vst [vmem:[%s2661 + $0x4] sm:$0xf] %v2598
        %2664 = vst [vmem:[%s2661 + $0x8] sm:$0xf] %v2599
        %2665 = vst [vmem:[%s2661 + $0xc] sm:$0xf] %v2600
        %2666 = vst [vmem:[%s2661 + $0x10] sm:$0xf] %v2601
        %2667 = vst [vmem:[%s2661 + $0x14] sm:$0xf] %v2602
        %2668 = vst [vmem:[%s2661 + $0x18] sm:$0xf] %v2603
        %2669 = vst [vmem:[%s2661 + $0x1c] sm:$0xf] %v2604
        %2670 = vst [vmem:[%s2661 + $0x80] sm:$0xf] %v2605
        %2671 = vst [vmem:[%s2661 + $0x84] sm:$0xf] %v2606
        %2672 = vst [vmem:[%s2661 + $0x88] sm:$0xf] %v2607
        %2673 = vst [vmem:[%s2661 + $0x8c] sm:$0xf] %v2608
        %2674 = vst [vmem:[%s2661 + $0x90] sm:$0xf] %v2609
        %2675 = vst [vmem:[%s2661 + $0x94] sm:$0xf] %v2610
        %2676 = vst [vmem:[%s2661 + $0x98] sm:$0xf] %v2611
        %2677 = vst [vmem:[%s2661 + $0x9c] sm:$0xf] %v2612
        %2678 = vst [vmem:[%s2661 + $0x100] sm:$0xf] %v2613
        %2679 = vst [vmem:[%s2661 + $0x104] sm:$0xf] %v2614
        %2680 = vst [vmem:[%s2661 + $0x108] sm:$0xf] %v2615
        %2681 = vst [vmem:[%s2661 + $0x10c] sm:$0xf] %v2616
        %2682 = vst [vmem:[%s2661 + $0x110] sm:$0xf] %v2617
        %2683 = vst [vmem:[%s2661 + $0x114] sm:$0xf] %v2618
        %2684 = vst [vmem:[%s2661 + $0x118] sm:$0xf] %v2619
        %2685 = vst [vmem:[%s2661 + $0x11c] sm:$0xf] %v2620
        %2686 = vst [vmem:[%s2661 + $0x180] sm:$0xf] %v2621
        %2687 = vst [vmem:[%s2661 + $0x184] sm:$0xf] %v2622
        %2688 = vst [vmem:[%s2661 + $0x188] sm:$0xf] %v2623
        %2689 = vst [vmem:[%s2661 + $0x18c] sm:$0xf] %v2624
        %2690 = vst [vmem:[%s2661 + $0x190] sm:$0xf] %v2625
        %2691 = vst [vmem:[%s2661 + $0x194] sm:$0xf] %v2626
        %2692 = vst [vmem:[%s2661 + $0x198] sm:$0xf] %v2627
        %2693 = vst [vmem:[%s2661 + $0x19c] sm:$0xf] %v2628
        %v2694 = vld [vmem:[%s282] sm:$0x1]
        %v2695 = vadd.f32 %v2407, %v2410
        %v2696 = vadd.f32 %v2695, %v2415
        %v2697 = vadd.f32 %v2696, %v2418
        %v2698 = vadd.f32 %v2697, %v2423
        %v2699 = vadd.f32 %v2698, %v2426
        %v2700 = vadd.f32 %v2699, %v2431
        %v2701 = vadd.f32 %v2700, %v2434
        %v2702 = vadd.f32 %v2701, %v2439
        %v2703 = vadd.f32 %v2702, %v2442
        %v2704 = vadd.f32 %v2703, %v2447
        %v2705 = vadd.f32 %v2704, %v2450
        %v2706 = vadd.f32 %v2705, %v2455
        %v2707 = vadd.f32 %v2706, %v2458
        %v2708 = vadd.f32 %v2707, %v2463
        %v2709 = vadd.f32 %v2708, %v2466
        %v2710 = vadd.f32 %v2709, %v2471
        %v2711 = vadd.f32 %v2710, %v2474
        %v2712 = vadd.f32 %v2711, %v2479
        %v2713 = vadd.f32 %v2712, %v2482
        %v2714 = vadd.f32 %v2713, %v2487
        %v2715 = vadd.f32 %v2714, %v2490
        %v2716 = vadd.f32 %v2715, %v2495
        %v2717 = vadd.f32 %v2716, %v2498
        %v2718 = vadd.f32 %v2717, %v2503
        %v2719 = vadd.f32 %v2718, %v2506
        %v2720 = vadd.f32 %v2719, %v2511
        %v2721 = vadd.f32 %v2720, %v2514
        %v2722 = vadd.f32 %v2721, %v2519
        %v2723 = vadd.f32 %v2722, %v2522
        %v2724 = vadd.f32 %v2723, %v2527
        %v2725 = vadd.f32 %v2724, %v2530
        %v2726 = vrot.slane %v2725, 4
        %v2727 = vadd.f32 %v2725, %v2726
        %v2728 = vrot.slane %v2727, 2
        %v2729 = vadd.f32 %v2727, %v2728
        %v2730 = vrot.slane %v2729, 1
        %v2731 = vadd.f32 %v2729, %v2730
        %v2732 = vadd.f32 %v2694, %v2731
        %2733 = vst [vmem:[%s282] sm:$0x1] %v2732
        %v2734 = vld [vmem:[%s288] sm:$0x1]
        %v2735 = vmul.f32 %v2407, %v2407
        %v2736 = vmul.f32 %v2410, %v2410
        %v2737 = vmul.f32 %v2415, %v2415
        %v2738 = vmul.f32 %v2418, %v2418
        %v2739 = vmul.f32 %v2423, %v2423
        %v2740 = vmul.f32 %v2426, %v2426
        %v2741 = vmul.f32 %v2431, %v2431
        %v2742 = vmul.f32 %v2434, %v2434
        %v2743 = vmul.f32 %v2439, %v2439
        %v2744 = vmul.f32 %v2442, %v2442
        %v2745 = vmul.f32 %v2447, %v2447
        %v2746 = vmul.f32 %v2450, %v2450
        %v2747 = vmul.f32 %v2455, %v2455
        %v2748 = vmul.f32 %v2458, %v2458
        %v2749 = vmul.f32 %v2463, %v2463
        %v2750 = vmul.f32 %v2466, %v2466
        %v2751 = vmul.f32 %v2471, %v2471
        %v2752 = vmul.f32 %v2474, %v2474
        %v2753 = vmul.f32 %v2479, %v2479
        %v2754 = vmul.f32 %v2482, %v2482
        %v2755 = vmul.f32 %v2487, %v2487
        %v2756 = vmul.f32 %v2490, %v2490
        %v2757 = vmul.f32 %v2495, %v2495
        %v2758 = vmul.f32 %v2498, %v2498
        %v2759 = vmul.f32 %v2503, %v2503
        %v2760 = vmul.f32 %v2506, %v2506
        %v2761 = vmul.f32 %v2511, %v2511
        %v2762 = vmul.f32 %v2514, %v2514
        %v2763 = vmul.f32 %v2519, %v2519
        %v2764 = vmul.f32 %v2522, %v2522
        %v2765 = vmul.f32 %v2527, %v2527
        %v2766 = vmul.f32 %v2530, %v2530
        %v2767 = vadd.f32 %v2735, %v2736
        %v2768 = vadd.f32 %v2767, %v2737
        %v2769 = vadd.f32 %v2768, %v2738
        %v2770 = vadd.f32 %v2769, %v2739
        %v2771 = vadd.f32 %v2770, %v2740
        %v2772 = vadd.f32 %v2771, %v2741
        %v2773 = vadd.f32 %v2772, %v2742
        %v2774 = vadd.f32 %v2773, %v2743
        %v2775 = vadd.f32 %v2774, %v2744
        %v2776 = vadd.f32 %v2775, %v2745
        %v2777 = vadd.f32 %v2776, %v2746
        %v2778 = vadd.f32 %v2777, %v2747
        %v2779 = vadd.f32 %v2778, %v2748
        %v2780 = vadd.f32 %v2779, %v2749
        %v2781 = vadd.f32 %v2780, %v2750
        %v2782 = vadd.f32 %v2781, %v2751
        %v2783 = vadd.f32 %v2782, %v2752
        %v2784 = vadd.f32 %v2783, %v2753
        %v2785 = vadd.f32 %v2784, %v2754
        %v2786 = vadd.f32 %v2785, %v2755
        %v2787 = vadd.f32 %v2786, %v2756
        %v2788 = vadd.f32 %v2787, %v2757
        %v2789 = vadd.f32 %v2788, %v2758
        %v2790 = vadd.f32 %v2789, %v2759
        %v2791 = vadd.f32 %v2790, %v2760
        %v2792 = vadd.f32 %v2791, %v2761
        %v2793 = vadd.f32 %v2792, %v2762
        %v2794 = vadd.f32 %v2793, %v2763
        %v2795 = vadd.f32 %v2794, %v2764
        %v2796 = vadd.f32 %v2795, %v2765
        %v2797 = vadd.f32 %v2796, %v2766
        %v2798 = vrot.slane %v2797, 4
        %v2799 = vadd.f32 %v2797, %v2798
        %v2800 = vrot.slane %v2799, 2
        %v2801 = vadd.f32 %v2799, %v2800
        %v2802 = vrot.slane %v2801, 1
        %v2803 = vadd.f32 %v2801, %v2802
        %v2804 = vadd.f32 %v2734, %v2803
        %2805 = vst [vmem:[%s288] sm:$0x1] %v2804
        %s2806 = sand.u32 %s97, 1
        %s2807 = scalar_lea.sflag [#allocation4], %s2806
        %s2808 = sand.u32 %s97, 1
        %s2809 = smul.addr %s2808, 512
        %s2810 = scalar_lea.vmem [#allocation7], %s2809
        %s2811 = sand.u32 %s26, 1
        %s2812 = scalar_lea.sflag [#allocation9], %s2811
        %s2813 = sand.u32 %s123, 1
        %s2814 = scalar_lea.vmem [#allocation8], %s2813
        %s2815 = sand.u32 %s26, 1
        %s2816 = scalar_lea.sflag [#allocation9], %s2815
        %s2817 = sand.u32 %s149, 1
        %s2818 = scalar_lea.vmem [#allocation10], %s2817
        // Predicated region
        $region41: #{tpu_custom_call.1} parent=27 // pred_check
          %p2819 = pneg %p107
        $region42: #{tpu_custom_call.1} parent=27 // pred_check_branch
          %2821 = sbr.rel (%p2819) target = $region44
        $region43: #{tpu_custom_call.1} parent=27 // pred_region
          #allocation14 [shape = 'u32[6]{0}', space=smem, size = 0x18, scoped, tag = 'DMA stride descriptor']
          %s2822 = sadd.s32 %s30, %s31
          %s2823 = smul.u32 32, %s2822
          %s2825 = ssub.s32 8192, 8192
          %2826 = vsyncadd %s2807, %s2825
          %s2827 = smul.addr %s2823, 64
          %s2828 = scalar_lea.hbm %s2, %s2827
          %s2830 = sshll.u32 1, 14
          %s2831 = sxor.u32 4294967295, %s2830
          %s2834 = sshll.u32 7, 18
          %s2835 = sxor.u32 4294967295, %s2834
          %s2836 = sand.u32 0, %s2835
          %s2838 = sor.u32 %s2836, 0
          %s2840 = sshll.u32 3, 24
          %s2841 = sxor.u32 4294967295, %s2840
          %s2842 = sand.u32 %s2838, %s2841
          %s2844 = sor.u32 %s2842, 0
          %s2845 = sshll.u32 %s2810, 4
          %s2846 = int_to_ptr.vmem [resolvable:$true] %s2845
          %2852 = sst [smem:[#allocation14]] 2048
          %s2853 = scalar_lea.smem [#allocation14], 1
          %2854 = sst [smem:[%s2853]] 4096
          %s2855 = scalar_lea.smem [#allocation14], 2
          %2856 = sst [smem:[%s2855]] 32
          %s2857 = scalar_lea.smem [#allocation14], 3
          %2858 = sst [smem:[%s2857]] 64
          %s2859 = scalar_lea.smem [#allocation14], 4
          %2860 = sst [smem:[%s2859]] 64
          %s2861 = scalar_lea.smem [#allocation14], 5
          %2862 = sst [smem:[%s2861]] 4
          %2864 = dma.general %s2846, 8192, %s2828, %s2807, [#allocation13], [#allocation14], %s2844, 0
        $region44: #{tpu_custom_call.1} parent=27 // pred_fallthru
          _
        // Predicated region
        $region45: #{tpu_custom_call.1} parent=27 // pred_check
          %p2865 = pneg %p133
        $region46: #{tpu_custom_call.1} parent=27 // pred_check_branch
          %2867 = sbr.rel (%p2865) target = $region48
        $region47: #{tpu_custom_call.1} parent=27 // pred_region
          %s2869 = ssub.s32 16, 16
          %2870 = vsyncadd %s2812, %s2869
          %s2871 = smul.addr %s30, 16
          %s2872 = scalar_lea.hbm %s3, %s2871
          %s2874 = sshll.u32 %s2814, 4
          %s2875 = int_to_ptr.vmem [resolvable:$true] %s2874
          %2877 = dma.vmem_to_hbm [thread:$0]  %s2875, 16, %s2872, %s2812
        $region48: #{tpu_custom_call.1} parent=27 // pred_fallthru
          _
        // Predicated region
        $region49: #{tpu_custom_call.1} parent=27 // pred_check
          %p2878 = pneg %p159
        $region50: #{tpu_custom_call.1} parent=27 // pred_check_branch
          %2880 = sbr.rel (%p2878) target = $region52
        $region51: #{tpu_custom_call.1} parent=27 // pred_region
          %s2882 = ssub.s32 16, 16
          %2883 = vsyncadd %s2816, %s2882
          %s2884 = smul.addr %s30, 16
          %s2885 = scalar_lea.hbm %s4, %s2884
          %s2887 = sshll.u32 %s2818, 4
          %s2888 = int_to_ptr.vmem [resolvable:$true] %s2887
          %2890 = dma.vmem_to_hbm [thread:$0]  %s2888, 16, %s2885, %s2816
        $region52: #{tpu_custom_call.1} parent=27 // pred_fallthru
          _
      $region28: #{tpu_custom_call.1} parent=5 // pred_fallthru
        _
      %p2891 = scmp.le.s32.totalorder 2, %s21
      // Predicated region
      $region53: #{tpu_custom_call.1} parent=5 // pred_check
        %p2892 = pneg %p2891
      $region54: #{tpu_custom_call.1} parent=5 // pred_check_branch
        %2894 = sbr.rel (%p2892) target = $region56
      $region55: #{tpu_custom_call.1} parent=5 // pred_region
        %s2895 = ssub.s32 %s21, 2
        // Predicated region
        $region57: #{tpu_custom_call.1} parent=55 // pred_check
          %p2896 = pneg %p113
        $region58: #{tpu_custom_call.1} parent=55 // pred_check_branch
          %2898 = sbr.rel (%p2896) target = $region60
        $region59: #{tpu_custom_call.1} parent=55 // pred_region
          %s2899 = sand.u32 %s98, 1
          %s2900 = scalar_lea.sflag [#allocation4], %s2899
          %s2901 = sand.u32 %s98, 1
          %s2902 = smul.addr %s2901, 512
          %s2903 = scalar_lea.vmem [#allocation7], %s2902
          %2904 = dma.done %s2900, 8192
        $region60: #{tpu_custom_call.1} parent=55 // pred_fallthru
          _
        // Predicated region
        $region61: #{tpu_custom_call.1} parent=55 // pred_check
          %p2905 = pneg %p139
        $region62: #{tpu_custom_call.1} parent=55 // pred_check_branch
          %2907 = sbr.rel (%p2905) target = $region64
        $region63: #{tpu_custom_call.1} parent=55 // pred_region
          %s2908 = sand.u32 %s27, 1
          %s2909 = scalar_lea.sflag [#allocation9], %s2908
          %s2910 = sand.u32 %s124, 1
          %s2911 = scalar_lea.vmem [#allocation8], %s2910
          %2912 = dma.done %s2909, 16
        $region64: #{tpu_custom_call.1} parent=55 // pred_fallthru
          _
        // Predicated region
        $region65: #{tpu_custom_call.1} parent=55 // pred_check
          %p2913 = pneg %p165
        $region66: #{tpu_custom_call.1} parent=55 // pred_check_branch
          %2915 = sbr.rel (%p2913) target = $region68
        $region67: #{tpu_custom_call.1} parent=55 // pred_region
          %s2916 = sand.u32 %s27, 1
          %s2917 = scalar_lea.sflag [#allocation9], %s2916
          %s2918 = sand.u32 %s150, 1
          %s2919 = scalar_lea.vmem [#allocation10], %s2918
          %2920 = dma.done %s2917, 16
        $region68: #{tpu_custom_call.1} parent=55 // pred_fallthru
          _
      $region56: #{tpu_custom_call.1} parent=5 // pred_fallthru
        _
    $region6: #{tpu_custom_call.1} parent=1 // loop_footer
      %s25 = sadd.s32 1, %s21
    $region7: #{tpu_custom_call.1} parent=1 // loop_footer_branch
      %20 = sbr.rel target = $region3
    $region8: #{tpu_custom_call.1} parent=1 // loop_exit
      _
    %2921 = vsyncpa [#allocation3], 1
    %s2922 = scalar_lea.sflag [#allocation3], 1
    %2923 = vsyncpa %s2922, 1
    %2924 = vsyncpa [#allocation6], 1
    %2925 = vsyncpa [#allocation4], 1
    %s2926 = scalar_lea.sflag [#allocation4], 1
    %2927 = vsyncpa %s2926, 1
    %2928 = vsyncpa [#allocation9], 1
    %s2929 = scalar_lea.sflag [#allocation9], 1
    %2930 = vsyncpa %s2929, 1

</llo_original>
